<compile_context>
chip_gen: v6e
topology: v6e:2x2x1
jax: 0.10.0
libtpu: 0.0.40
codegen_flags: <defaults>
</compile_context>

<pallas_src>
from functools import partial

import jax
import jax.numpy as jnp
from jax import lax
from jax.experimental import pallas as pl
from jax.experimental.pallas import tpu as pltpu

EPS = 1e-5  # PyTorch BatchNorm2d default eps


def _block_kernel(x_ref, s1_ref, b1_ref, b2_ref, w1_ref, w2_ref, ws_ref,
                  out_ref, *, H, W, bb, shortcut_conv):
    """bb images of PreActGroupedBlock (stride=1), lane-packed (C, bb*H*W)."""
    HW = H * W
    L = bb * HW
    f32 = jnp.float32
    bf16 = jnp.bfloat16

    x = x_ref[...]                                           # (Cin, L) f32

    # ---- BN1 + ReLU (folded scale/bias, lane-broadcast) ----
    a1 = jnp.maximum(x * s1_ref[...] + b1_ref[...], 0.0)     # (Cin, L) f32

    # ---- boundary masks for the 9 conv taps (per-image flat index) ----
    taps = [(dy, dx) for dy in (-1, 0, 1) for dx in (-1, 0, 1)]
    col = lax.broadcasted_iota(jnp.int32, (1, L), 1) % HW    # idx within image
    wmod = col % W                                           # column index

    def tap_mask(dy, dx):
        conds = []
        if dy == -1:
            conds.append(col >= W)                 # row h-1 exists
        elif dy == 1:
            conds.append(col < (H - 1) * W)        # row h+1 exists
        if dx == -1:
            conds.append(wmod != 0)                # col w-1 exists
        elif dx == 1:
            conds.append(wmod != (W - 1))          # col w+1 exists
        if not conds:
            return None
        m = conds[0]
        for c in conds[1:]:
            m = m & c
        return m

    masks = [tap_mask(dy, dx) for dy, dx in taps]

    def tap_slab(a):
        # Stack 9 shifted/masked copies along the contraction axis -> (9*C, L).
        parts = []
        for t, (dy, dx) in enumerate(taps):
            s = dy * W + dx
            v = pltpu.roll(a, (-s) % L, axis=1) if s != 0 else a   # XLU roll
            if masks[t] is not None:
                v = jnp.where(masks[t], v, 0.0)
            parts.append(v)
        return jnp.concatenate(parts, axis=0).astype(bf16)

    # ---- conv1: grouped 3x3 (BN2 scale pre-folded into rows) = ONE matmul ----
    acc1 = jnp.dot(w1_ref[...], tap_slab(a1), preferred_element_type=f32)
    a2 = jnp.maximum(acc1 + b2_ref[...], 0.0)                # BN2 bias + ReLU

    # ---- shortcut: grouped 1x1 conv on relu(bn1(x)) or identity ----
    if shortcut_conv:
        acc2 = jnp.dot(ws_ref[...], a1.astype(bf16), preferred_element_type=f32)
    else:
        acc2 = x                                             # identity

    # ---- conv2: grouped 3x3 = ONE matmul, accumulated onto the shortcut ----
    acc2 = acc2 + jnp.dot(w2_ref[...], tap_slab(a2), preferred_element_type=f32)

    out_ref[...] = acc2                          # full-width, lane-dense store


def _stack_tap_weights(w, groups, out_scale=None):
    """Grouped-conv weight (Cout, Cin_g, kh, kw) -> block-diagonal
    (Cout, kh*kw*Cin) in bf16, contraction ordered tap-major / channel-minor."""
    cout, cin_g, kh, kw = w.shape
    cin = cin_g * groups
    pg = cout // groups
    w = w.astype(jnp.float32)
    if out_scale is not None:
        w = w * out_scale[:, None, None, None]          # fold BN scale per row
    wt = jnp.transpose(w, (2, 3, 0, 1)).reshape(kh * kw, cout, cin_g)
    full = jnp.zeros((kh * kw, cout, cin), jnp.float32)
    for g in range(groups):
        full = full.at[:, g * pg:(g + 1) * pg, g * cin_g:(g + 1) * cin_g].set(
            wt[:, g * pg:(g + 1) * pg, :])
    return jnp.transpose(full, (1, 0, 2)).reshape(
        cout, kh * kw * cin).astype(jnp.bfloat16)


def preact_grouped_block(x, params, *, planes, stride=1, groups=3,
                         batch_block=None):
    N, in_planes, H, W = x.shape
    if stride != 1:
        # TODO(synk): stride > 1 (spatial downsampling) not implemented.
        raise NotImplementedError("stride > 1 not supported by this kernel")
    HW = H * W
    shortcut_conv = (stride != 1) or (in_planes != planes)

    if batch_block is None:
        batch_block = 2 if N % 2 == 0 else 1    # keep grid >= 2 (v7x megacore)
    if N % batch_block != 0:
        raise ValueError("batch must be divisible by batch_block")
    L = batch_block * HW

    # Fold eval-mode BatchNorm into per-channel scale / bias.
    s1 = params["g1"] / jnp.sqrt(params["v1"] + EPS)
    b1 = params["b1"] - params["m1"] * s1
    s2 = params["g2"] / jnp.sqrt(params["v2"] + EPS)
    b2 = params["b2"] - params["m2"] * s2

    # Tap-stacked block-diagonal weights (bf16); BN2 scale folded into conv1.
    w1s = _stack_tap_weights(params["w1"], groups, out_scale=s2)  # (P, 9*Cin)
    w2s = _stack_tap_weights(params["w2"], groups)                # (P, 9*P)
    if shortcut_conv:
        wss = _stack_tap_weights(params["ws"], groups)            # (P, Cin)
    else:
        wss = jnp.zeros((planes, in_planes), jnp.bfloat16)        # unused

    # Lane-packed layout: (C, N*HW) with batch folded into the lane dimension.
    x2 = jnp.transpose(x.reshape(N, in_planes, HW), (1, 0, 2)).reshape(
        in_planes, N * HW).astype(jnp.float32)

    kernel = partial(_block_kernel, H=H, W=W, bb=batch_block,
                     shortcut_conv=shortcut_conv)

    out = pl.pallas_call(
        kernel,
        out_shape=jax.ShapeDtypeStruct((planes, N * HW), jnp.float32),
        grid=(N // batch_block,),
        in_specs=[
            pl.BlockSpec((in_planes, L), lambda n: (0, n)),            # x slab
            pl.BlockSpec((in_planes, 1), lambda n: (0, 0)),            # s1
            pl.BlockSpec((in_planes, 1), lambda n: (0, 0)),            # b1
            pl.BlockSpec((planes, 1), lambda n: (0, 0)),               # b2
            pl.BlockSpec((planes, 9 * in_planes), lambda n: (0, 0)),   # w1 (s2-folded)
            pl.BlockSpec((planes, 9 * planes), lambda n: (0, 0)),      # w2
            pl.BlockSpec((planes, in_planes), lambda n: (0, 0)),       # ws
        ],
        out_specs=pl.BlockSpec((planes, L), lambda n: (0, n)),
        compiler_params=pltpu.CompilerParams(
            dimension_semantics=("parallel",)),
    )(x2,
      s1.reshape(in_planes, 1).astype(jnp.float32),
      b1.reshape(in_planes, 1).astype(jnp.float32),
      b2.reshape(planes, 1).astype(jnp.float32),
      w1s, w2s, wss)

    return jnp.transpose(out.reshape(planes, N, HW), (1, 0, 2)).reshape(
        N, planes, H, W)


# ------------------------- pure-JAX reference (NCHW) -------------------------
def _reference(x, p, groups=3):
    def bn(t, g, b, m, v):
        br = lambda a: a[None, :, None, None]
        return br(g) * (t - br(m)) / jnp.sqrt(br(v) + EPS) + br(b)

    def gconv(t, w, pad):
        return lax.conv_general_dilated(
            t, w, (1, 1), ((pad, pad), (pad, pad)),
            dimension_numbers=("NCHW", "OIHW", "NCHW"),
            feature_group_count=groups)

    out = jax.nn.relu(bn(x, p["g1"], p["b1"], p["m1"], p["v1"]))
    shortcut = gconv(out, p["ws"], 0)
    out = gconv(out, p["w1"], 1)
    out = gconv(jax.nn.relu(bn(out, p["g2"], p["b2"], p["m2"], p["v2"])),
                p["w2"], 1)
    return out + shortcut


# ----------------------------------- main ------------------------------------
if __name__ == "__main__":
    in_planes, planes, groups = 6, 12, 3   # in_planes != planes -> shortcut conv
    N, H, W = 4, 16, 16

    key = jax.random.PRNGKey(0)
    ks = jax.random.split(key, 12)

    params = {
        # BatchNorm1 (eval-mode running stats + affine)
        "g1": 0.5 + jax.random.uniform(ks[0], (in_planes,), jnp.float32),
        "b1": 0.1 * jax.random.normal(ks[1], (in_planes,), jnp.float32),
        "m1": 0.1 * jax.random.normal(ks[2], (in_planes,), jnp.float32),
        "v1": 0.5 + jax.random.uniform(ks[3], (in_planes,), jnp.float32),
        # conv1: (planes, in_planes/groups, 3, 3)
        "w1": 0.3 * jax.random.normal(ks[4], (planes, in_planes // groups, 3, 3), jnp.float32),
        # BatchNorm2
        "g2": 0.5 + jax.random.uniform(ks[5], (planes,), jnp.float32),
        "b2": 0.1 * jax.random.normal(ks[6], (planes,), jnp.float32),
        "m2": 0.1 * jax.random.normal(ks[7], (planes,), jnp.float32),
        "v2": 0.5 + jax.random.uniform(ks[8], (planes,), jnp.float32),
        # conv2: (planes, planes/groups, 3, 3)
        "w2": 0.3 * jax.random.normal(ks[9], (planes, planes // groups, 3, 3), jnp.float32),
        # shortcut 1x1 grouped conv: (planes, in_planes/groups, 1, 1)
        "ws": 0.3 * jax.random.normal(ks[10], (planes, in_planes // groups, 1, 1), jnp.float32),
    }

    x = jax.random.normal(ks[11], (N, in_planes, H, W), jnp.float32)

    out = preact_grouped_block(x, params, planes=planes, groups=groups)
    out = jax.block_until_ready(out)

    ref = jax.block_until_ready(_reference(x, params, groups=groups))

    assert out.shape == (N, planes, H, W), out.shape
    # bf16 matmul operands (f32 accumulation) -> ~1% drift; scale-relative check.
    err = float(jnp.max(jnp.abs(out - ref)))
    scale = float(jnp.max(jnp.abs(ref)))
    assert err <= 2e-2 * scale + 1e-4, (err, scale)

    print("KERNEL_OK")
</pallas_src>

<mosaic_0001>
module attributes {stable_mosaic.version = 11 : i64} {
  func.func @_block_kernel(%arg0: i32, %arg1: memref<6x512xf32, #tpu.memory_space<vmem>>, %arg2: memref<6x1xf32, #tpu.memory_space<vmem>>, %arg3: memref<6x1xf32, #tpu.memory_space<vmem>>, %arg4: memref<12x1xf32, #tpu.memory_space<vmem>>, %arg5: memref<12x54xbf16, #tpu.memory_space<vmem>>, %arg6: memref<12x108xbf16, #tpu.memory_space<vmem>>, %arg7: memref<12x6xbf16, #tpu.memory_space<vmem>>, %arg8: memref<12x512xf32, #tpu.memory_space<vmem>>) attributes {dimension_semantics = [#tpu.dimension_semantics<parallel>], iteration_bounds = array<i64: 2>, scalar_prefetch = 0 : i64, scratch_operands = 0 : i64, tpu.core_type = #tpu.core_type<tc>, window_params = [{transform_indices = @transform_0, window_bounds = array<i64: 6, 512>}, {pipeline_mode = #tpu.pipeline_mode<synchronous>, transform_indices = @transform_1, window_bounds = array<i64: 6, 1>}, {pipeline_mode = #tpu.pipeline_mode<synchronous>, transform_indices = @transform_2, window_bounds = array<i64: 6, 1>}, {pipeline_mode = #tpu.pipeline_mode<synchronous>, transform_indices = @transform_3, window_bounds = array<i64: 12, 1>}, {pipeline_mode = #tpu.pipeline_mode<synchronous>, transform_indices = @transform_4, window_bounds = array<i64: 12, 54>}, {pipeline_mode = #tpu.pipeline_mode<synchronous>, transform_indices = @transform_5, window_bounds = array<i64: 12, 108>}, {pipeline_mode = #tpu.pipeline_mode<synchronous>, transform_indices = @transform_6, window_bounds = array<i64: 12, 6>}, {transform_indices = @transform_7, window_bounds = array<i64: 12, 512>}]} {
    %c0 = arith.constant 0 : index
    %c0_0 = arith.constant 0 : index
    %0 = vector.load %arg1[%c0, %c0_0] : memref<6x512xf32, #tpu.memory_space<vmem>>, vector<6x512xf32>
    %c0_1 = arith.constant 0 : index
    %c0_2 = arith.constant 0 : index
    %1 = vector.load %arg2[%c0_1, %c0_2] : memref<6x1xf32, #tpu.memory_space<vmem>>, vector<6x1xf32>
    %2 = vector.broadcast %1 : vector<6x1xf32> to vector<6x512xf32>
    %3 = arith.mulf %0, %2 : vector<6x512xf32>
    %c0_3 = arith.constant 0 : index
    %c0_4 = arith.constant 0 : index
    %4 = vector.load %arg3[%c0_3, %c0_4] : memref<6x1xf32, #tpu.memory_space<vmem>>, vector<6x1xf32>
    %5 = vector.broadcast %4 : vector<6x1xf32> to vector<6x512xf32>
    %6 = arith.addf %3, %5 : vector<6x512xf32>
    %cst = arith.constant 0.000000e+00 : f32
    %7 = vector.broadcast %cst : f32 to vector<6x512xf32>
    %8 = arith.maximumf %6, %7 : vector<6x512xf32>
    %9 = tpu.iota {dimensions = array<i32: 1>} : vector<1x512xi32>
    %c256_i32 = arith.constant 256 : i32
    %c0_i32 = arith.constant 0 : i32
    %10 = arith.cmpi eq, %c256_i32, %c0_i32 : i32
    %c1_i32 = arith.constant 1 : i32
    %11 = arith.select %10, %c1_i32, %c256_i32 : i32
    %12 = vector.broadcast %11 : i32 to vector<1x512xi32>
    %13 = arith.remsi %9, %12 : vector<1x512xi32>
    %c0_i32_5 = arith.constant 0 : i32
    %14 = vector.broadcast %c0_i32_5 : i32 to vector<1x512xi32>
    %15 = arith.cmpi ne, %13, %14 : vector<1x512xi32>
    %c0_i32_6 = arith.constant 0 : i32
    %16 = vector.broadcast %c0_i32_6 : i32 to vector<1x512xi32>
    %17 = arith.cmpi slt, %13, %16 : vector<1x512xi32>
    %c0_i32_7 = arith.constant 0 : i32
    %18 = arith.cmpi slt, %11, %c0_i32_7 : i32
    %19 = vector.broadcast %18 : i1 to vector<1x512xi1>
    %20 = vector.broadcast %19 : vector<1x512xi1> to vector<1x512xi1>
    %21 = arith.xori %17, %20 : vector<1x512xi1>
    %22 = arith.andi %21, %15 : vector<1x512xi1>
    %23 = vector.broadcast %11 : i32 to vector<1x512xi32>
    %24 = arith.addi %13, %23 : vector<1x512xi32>
    %25 = arith.select %22, %24, %13 : vector<1x512xi1>, vector<1x512xi32>
    %c16_i32 = arith.constant 16 : i32
    %c0_i32_8 = arith.constant 0 : i32
    %26 = arith.cmpi eq, %c16_i32, %c0_i32_8 : i32
    %c1_i32_9 = arith.constant 1 : i32
    %27 = arith.select %26, %c1_i32_9, %c16_i32 : i32
    %28 = vector.broadcast %27 : i32 to vector<1x512xi32>
    %29 = arith.remsi %25, %28 : vector<1x512xi32>
    %c0_i32_10 = arith.constant 0 : i32
    %30 = vector.broadcast %c0_i32_10 : i32 to vector<1x512xi32>
    %31 = arith.cmpi ne, %29, %30 : vector<1x512xi32>
    %c0_i32_11 = arith.constant 0 : i32
    %32 = vector.broadcast %c0_i32_11 : i32 to vector<1x512xi32>
    %33 = arith.cmpi slt, %29, %32 : vector<1x512xi32>
    %c0_i32_12 = arith.constant 0 : i32
    %34 = arith.cmpi slt, %27, %c0_i32_12 : i32
    %35 = vector.broadcast %34 : i1 to vector<1x512xi1>
    %36 = vector.broadcast %35 : vector<1x512xi1> to vector<1x512xi1>
    %37 = arith.xori %33, %36 : vector<1x512xi1>
    %38 = arith.andi %37, %31 : vector<1x512xi1>
    %39 = vector.broadcast %27 : i32 to vector<1x512xi32>
    %40 = arith.addi %29, %39 : vector<1x512xi32>
    %41 = arith.select %38, %40, %29 : vector<1x512xi1>, vector<1x512xi32>
    %c16_i32_13 = arith.constant 16 : i32
    %42 = vector.broadcast %c16_i32_13 : i32 to vector<1x512xi32>
    %43 = arith.cmpi sge, %25, %42 : vector<1x512xi32>
    %c0_i32_14 = arith.constant 0 : i32
    %44 = vector.broadcast %c0_i32_14 : i32 to vector<1x512xi32>
    %45 = arith.cmpi ne, %41, %44 : vector<1x512xi32>
    %46 = arith.andi %43, %45 : vector<1x512xi1>
    %c16_i32_15 = arith.constant 16 : i32
    %47 = vector.broadcast %c16_i32_15 : i32 to vector<1x512xi32>
    %48 = arith.cmpi sge, %25, %47 : vector<1x512xi32>
    %c16_i32_16 = arith.constant 16 : i32
    %49 = vector.broadcast %c16_i32_16 : i32 to vector<1x512xi32>
    %50 = arith.cmpi sge, %25, %49 : vector<1x512xi32>
    %c15_i32 = arith.constant 15 : i32
    %51 = vector.broadcast %c15_i32 : i32 to vector<1x512xi32>
    %52 = arith.cmpi ne, %41, %51 : vector<1x512xi32>
    %53 = arith.andi %50, %52 : vector<1x512xi1>
    %c0_i32_17 = arith.constant 0 : i32
    %54 = vector.broadcast %c0_i32_17 : i32 to vector<1x512xi32>
    %55 = arith.cmpi ne, %41, %54 : vector<1x512xi32>
    %c15_i32_18 = arith.constant 15 : i32
    %56 = vector.broadcast %c15_i32_18 : i32 to vector<1x512xi32>
    %57 = arith.cmpi ne, %41, %56 : vector<1x512xi32>
    %c240_i32 = arith.constant 240 : i32
    %58 = vector.broadcast %c240_i32 : i32 to vector<1x512xi32>
    %59 = arith.cmpi slt, %25, %58 : vector<1x512xi32>
    %c0_i32_19 = arith.constant 0 : i32
    %60 = vector.broadcast %c0_i32_19 : i32 to vector<1x512xi32>
    %61 = arith.cmpi ne, %41, %60 : vector<1x512xi32>
    %62 = arith.andi %59, %61 : vector<1x512xi1>
    %c240_i32_20 = arith.constant 240 : i32
    %63 = vector.broadcast %c240_i32_20 : i32 to vector<1x512xi32>
    %64 = arith.cmpi slt, %25, %63 : vector<1x512xi32>
    %c240_i32_21 = arith.constant 240 : i32
    %65 = vector.broadcast %c240_i32_21 : i32 to vector<1x512xi32>
    %66 = arith.cmpi slt, %25, %65 : vector<1x512xi32>
    %c15_i32_22 = arith.constant 15 : i32
    %67 = vector.broadcast %c15_i32_22 : i32 to vector<1x512xi32>
    %68 = arith.cmpi ne, %41, %67 : vector<1x512xi32>
    %69 = arith.andi %66, %68 : vector<1x512xi1>
    %c0_23 = arith.constant 0 : index
    %c0_24 = arith.constant 0 : index
    %70 = vector.load %arg5[%c0_23, %c0_24] : memref<12x54xbf16, #tpu.memory_space<vmem>>, vector<12x54xbf16>
    %c17_i32 = arith.constant 17 : i32
    %71 = tpu.dynamic_rotate %8 by %c17_i32 dim 1 : vector<6x512xf32>, i32 -> vector<6x512xf32>
    %cst_25 = arith.constant 0.000000e+00 : f32
    %72 = vector.shape_cast %46 : vector<1x512xi1> to vector<1x512xi1>
    %73 = vector.broadcast %72 : vector<1x512xi1> to vector<6x512xi1>
    %74 = vector.broadcast %cst_25 : f32 to vector<6x512xf32>
    %75 = arith.select %73, %71, %74 : vector<6x512xi1>, vector<6x512xf32>
    %c16_i32_26 = arith.constant 16 : i32
    %76 = tpu.dynamic_rotate %8 by %c16_i32_26 dim 1 : vector<6x512xf32>, i32 -> vector<6x512xf32>
    %cst_27 = arith.constant 0.000000e+00 : f32
    %77 = vector.shape_cast %48 : vector<1x512xi1> to vector<1x512xi1>
    %78 = vector.broadcast %77 : vector<1x512xi1> to vector<6x512xi1>
    %79 = vector.broadcast %cst_27 : f32 to vector<6x512xf32>
    %80 = arith.select %78, %76, %79 : vector<6x512xi1>, vector<6x512xf32>
    %c15_i32_28 = arith.constant 15 : i32
    %81 = tpu.dynamic_rotate %8 by %c15_i32_28 dim 1 : vector<6x512xf32>, i32 -> vector<6x512xf32>
    %cst_29 = arith.constant 0.000000e+00 : f32
    %82 = vector.shape_cast %53 : vector<1x512xi1> to vector<1x512xi1>
    %83 = vector.broadcast %82 : vector<1x512xi1> to vector<6x512xi1>
    %84 = vector.broadcast %cst_29 : f32 to vector<6x512xf32>
    %85 = arith.select %83, %81, %84 : vector<6x512xi1>, vector<6x512xf32>
    %c1_i32_30 = arith.constant 1 : i32
    %86 = tpu.dynamic_rotate %8 by %c1_i32_30 dim 1 : vector<6x512xf32>, i32 -> vector<6x512xf32>
    %cst_31 = arith.constant 0.000000e+00 : f32
    %87 = vector.shape_cast %55 : vector<1x512xi1> to vector<1x512xi1>
    %88 = vector.broadcast %87 : vector<1x512xi1> to vector<6x512xi1>
    %89 = vector.broadcast %cst_31 : f32 to vector<6x512xf32>
    %90 = arith.select %88, %86, %89 : vector<6x512xi1>, vector<6x512xf32>
    %c511_i32 = arith.constant 511 : i32
    %91 = tpu.dynamic_rotate %8 by %c511_i32 dim 1 : vector<6x512xf32>, i32 -> vector<6x512xf32>
    %cst_32 = arith.constant 0.000000e+00 : f32
    %92 = vector.shape_cast %57 : vector<1x512xi1> to vector<1x512xi1>
    %93 = vector.broadcast %92 : vector<1x512xi1> to vector<6x512xi1>
    %94 = vector.broadcast %cst_32 : f32 to vector<6x512xf32>
    %95 = arith.select %93, %91, %94 : vector<6x512xi1>, vector<6x512xf32>
    %c497_i32 = arith.constant 497 : i32
    %96 = tpu.dynamic_rotate %8 by %c497_i32 dim 1 : vector<6x512xf32>, i32 -> vector<6x512xf32>
    %cst_33 = arith.constant 0.000000e+00 : f32
    %97 = vector.shape_cast %62 : vector<1x512xi1> to vector<1x512xi1>
    %98 = vector.broadcast %97 : vector<1x512xi1> to vector<6x512xi1>
    %99 = vector.broadcast %cst_33 : f32 to vector<6x512xf32>
    %100 = arith.select %98, %96, %99 : vector<6x512xi1>, vector<6x512xf32>
    %c496_i32 = arith.constant 496 : i32
    %101 = tpu.dynamic_rotate %8 by %c496_i32 dim 1 : vector<6x512xf32>, i32 -> vector<6x512xf32>
    %cst_34 = arith.constant 0.000000e+00 : f32
    %102 = vector.shape_cast %64 : vector<1x512xi1> to vector<1x512xi1>
    %103 = vector.broadcast %102 : vector<1x512xi1> to vector<6x512xi1>
    %104 = vector.broadcast %cst_34 : f32 to vector<6x512xf32>
    %105 = arith.select %103, %101, %104 : vector<6x512xi1>, vector<6x512xf32>
    %c495_i32 = arith.constant 495 : i32
    %106 = tpu.dynamic_rotate %8 by %c495_i32 dim 1 : vector<6x512xf32>, i32 -> vector<6x512xf32>
    %cst_35 = arith.constant 0.000000e+00 : f32
    %107 = vector.shape_cast %69 : vector<1x512xi1> to vector<1x512xi1>
    %108 = vector.broadcast %107 : vector<1x512xi1> to vector<6x512xi1>
    %109 = vector.broadcast %cst_35 : f32 to vector<6x512xf32>
    %110 = arith.select %108, %106, %109 : vector<6x512xi1>, vector<6x512xf32>
    %111 = tpu.concatenate %75, %80, %85, %90, %8, %95, %100, %105, %110 in 0 : vector<6x512xf32>, vector<6x512xf32>, vector<6x512xf32>, vector<6x512xf32>, vector<6x512xf32>, vector<6x512xf32>, vector<6x512xf32>, vector<6x512xf32>, vector<6x512xf32> -> vector<54x512xf32>
    %112 = arith.truncf %111 : vector<54x512xf32> to vector<54x512xbf16>
    %cst_36 = arith.constant dense<0.000000e+00> : vector<12x512xf32>
    %113 = tpu.matmul %70, %112, %cst_36 {dimension_numbers = #tpu.dot_dimension_numbers<[1], [0], [0], [1], [0, 0, 1, 1], [], []>} : vector<12x54xbf16>, vector<54x512xbf16>, vector<12x512xf32> -> vector<12x512xf32>
    %c0_37 = arith.constant 0 : index
    %c0_38 = arith.constant 0 : index
    %114 = vector.load %arg4[%c0_37, %c0_38] : memref<12x1xf32, #tpu.memory_space<vmem>>, vector<12x1xf32>
    %115 = vector.broadcast %114 : vector<12x1xf32> to vector<12x512xf32>
    %116 = arith.addf %113, %115 : vector<12x512xf32>
    %cst_39 = arith.constant 0.000000e+00 : f32
    %117 = vector.broadcast %cst_39 : f32 to vector<12x512xf32>
    %118 = arith.maximumf %116, %117 : vector<12x512xf32>
    %c0_40 = arith.constant 0 : index
    %c0_41 = arith.constant 0 : index
    %119 = vector.load %arg7[%c0_40, %c0_41] : memref<12x6xbf16, #tpu.memory_space<vmem>>, vector<12x6xbf16>
    %120 = arith.truncf %8 : vector<6x512xf32> to vector<6x512xbf16>
    %cst_42 = arith.constant dense<0.000000e+00> : vector<12x512xf32>
    %121 = tpu.matmul %119, %120, %cst_42 {dimension_numbers = #tpu.dot_dimension_numbers<[1], [0], [0], [1], [0, 0, 1, 1], [], []>} : vector<12x6xbf16>, vector<6x512xbf16>, vector<12x512xf32> -> vector<12x512xf32>
    %c0_43 = arith.constant 0 : index
    %c0_44 = arith.constant 0 : index
    %122 = vector.load %arg6[%c0_43, %c0_44] : memref<12x108xbf16, #tpu.memory_space<vmem>>, vector<12x108xbf16>
    %c17_i32_45 = arith.constant 17 : i32
    %123 = tpu.dynamic_rotate %118 by %c17_i32_45 dim 1 : vector<12x512xf32>, i32 -> vector<12x512xf32>
    %cst_46 = arith.constant 0.000000e+00 : f32
    %124 = vector.shape_cast %46 : vector<1x512xi1> to vector<1x512xi1>
    %125 = vector.broadcast %124 : vector<1x512xi1> to vector<12x512xi1>
    %126 = vector.broadcast %cst_46 : f32 to vector<12x512xf32>
    %127 = arith.select %125, %123, %126 : vector<12x512xi1>, vector<12x512xf32>
    %c16_i32_47 = arith.constant 16 : i32
    %128 = tpu.dynamic_rotate %118 by %c16_i32_47 dim 1 : vector<12x512xf32>, i32 -> vector<12x512xf32>
    %cst_48 = arith.constant 0.000000e+00 : f32
    %129 = vector.shape_cast %48 : vector<1x512xi1> to vector<1x512xi1>
    %130 = vector.broadcast %129 : vector<1x512xi1> to vector<12x512xi1>
    %131 = vector.broadcast %cst_48 : f32 to vector<12x512xf32>
    %132 = arith.select %130, %128, %131 : vector<12x512xi1>, vector<12x512xf32>
    %c15_i32_49 = arith.constant 15 : i32
    %133 = tpu.dynamic_rotate %118 by %c15_i32_49 dim 1 : vector<12x512xf32>, i32 -> vector<12x512xf32>
    %cst_50 = arith.constant 0.000000e+00 : f32
    %134 = vector.shape_cast %53 : vector<1x512xi1> to vector<1x512xi1>
    %135 = vector.broadcast %134 : vector<1x512xi1> to vector<12x512xi1>
    %136 = vector.broadcast %cst_50 : f32 to vector<12x512xf32>
    %137 = arith.select %135, %133, %136 : vector<12x512xi1>, vector<12x512xf32>
    %c1_i32_51 = arith.constant 1 : i32
    %138 = tpu.dynamic_rotate %118 by %c1_i32_51 dim 1 : vector<12x512xf32>, i32 -> vector<12x512xf32>
    %cst_52 = arith.constant 0.000000e+00 : f32
    %139 = vector.shape_cast %55 : vector<1x512xi1> to vector<1x512xi1>
    %140 = vector.broadcast %139 : vector<1x512xi1> to vector<12x512xi1>
    %141 = vector.broadcast %cst_52 : f32 to vector<12x512xf32>
    %142 = arith.select %140, %138, %141 : vector<12x512xi1>, vector<12x512xf32>
    %c511_i32_53 = arith.constant 511 : i32
    %143 = tpu.dynamic_rotate %118 by %c511_i32_53 dim 1 : vector<12x512xf32>, i32 -> vector<12x512xf32>
    %cst_54 = arith.constant 0.000000e+00 : f32
    %144 = vector.shape_cast %57 : vector<1x512xi1> to vector<1x512xi1>
    %145 = vector.broadcast %144 : vector<1x512xi1> to vector<12x512xi1>
    %146 = vector.broadcast %cst_54 : f32 to vector<12x512xf32>
    %147 = arith.select %145, %143, %146 : vector<12x512xi1>, vector<12x512xf32>
    %c497_i32_55 = arith.constant 497 : i32
    %148 = tpu.dynamic_rotate %118 by %c497_i32_55 dim 1 : vector<12x512xf32>, i32 -> vector<12x512xf32>
    %cst_56 = arith.constant 0.000000e+00 : f32
    %149 = vector.shape_cast %62 : vector<1x512xi1> to vector<1x512xi1>
    %150 = vector.broadcast %149 : vector<1x512xi1> to vector<12x512xi1>
    %151 = vector.broadcast %cst_56 : f32 to vector<12x512xf32>
    %152 = arith.select %150, %148, %151 : vector<12x512xi1>, vector<12x512xf32>
    %c496_i32_57 = arith.constant 496 : i32
    %153 = tpu.dynamic_rotate %118 by %c496_i32_57 dim 1 : vector<12x512xf32>, i32 -> vector<12x512xf32>
    %cst_58 = arith.constant 0.000000e+00 : f32
    %154 = vector.shape_cast %64 : vector<1x512xi1> to vector<1x512xi1>
    %155 = vector.broadcast %154 : vector<1x512xi1> to vector<12x512xi1>
    %156 = vector.broadcast %cst_58 : f32 to vector<12x512xf32>
    %157 = arith.select %155, %153, %156 : vector<12x512xi1>, vector<12x512xf32>
    %c495_i32_59 = arith.constant 495 : i32
    %158 = tpu.dynamic_rotate %118 by %c495_i32_59 dim 1 : vector<12x512xf32>, i32 -> vector<12x512xf32>
    %cst_60 = arith.constant 0.000000e+00 : f32
    %159 = vector.shape_cast %69 : vector<1x512xi1> to vector<1x512xi1>
    %160 = vector.broadcast %159 : vector<1x512xi1> to vector<12x512xi1>
    %161 = vector.broadcast %cst_60 : f32 to vector<12x512xf32>
    %162 = arith.select %160, %158, %161 : vector<12x512xi1>, vector<12x512xf32>
    %163 = tpu.concatenate %127, %132, %137, %142, %118, %147, %152, %157, %162 in 0 : vector<12x512xf32>, vector<12x512xf32>, vector<12x512xf32>, vector<12x512xf32>, vector<12x512xf32>, vector<12x512xf32>, vector<12x512xf32>, vector<12x512xf32>, vector<12x512xf32> -> vector<108x512xf32>
    %164 = arith.truncf %163 : vector<108x512xf32> to vector<108x512xbf16>
    %cst_61 = arith.constant dense<0.000000e+00> : vector<12x512xf32>
    %165 = tpu.matmul %122, %164, %cst_61 {dimension_numbers = #tpu.dot_dimension_numbers<[1], [0], [0], [1], [0, 0, 1, 1], [], []>} : vector<12x108xbf16>, vector<108x512xbf16>, vector<12x512xf32> -> vector<12x512xf32>
    %166 = arith.addf %121, %165 : vector<12x512xf32>
    %c0_62 = arith.constant 0 : index
    %c0_63 = arith.constant 0 : index
    %167 = vector.load %arg8[%c0_62, %c0_63] : memref<12x512xf32, #tpu.memory_space<vmem>>, vector<12x512xf32>
    tpu.vector_store %arg8[%c0_62, %c0_63], %166 {strides = array<i32>} : memref<12x512xf32, #tpu.memory_space<vmem>>, vector<12x512xf32>,
    return
  }
  func.func @transform_0(%arg0: i32) -> (i32, i32) {
    %c0_i32 = arith.constant 0 : i32
    %c0_i32_0 = arith.constant 0 : i32
    return %c0_i32, %arg0 : i32, i32
  }
  func.func @transform_1(%arg0: i32) -> (i32, i32) {
    %c0_i32 = arith.constant 0 : i32
    %c0_i32_0 = arith.constant 0 : i32
    %c0_i32_1 = arith.constant 0 : i32
    return %c0_i32, %c0_i32_0 : i32, i32
  }
  func.func @transform_2(%arg0: i32) -> (i32, i32) {
    %c0_i32 = arith.constant 0 : i32
    %c0_i32_0 = arith.constant 0 : i32
    %c0_i32_1 = arith.constant 0 : i32
    return %c0_i32, %c0_i32_0 : i32, i32
  }
  func.func @transform_3(%arg0: i32) -> (i32, i32) {
    %c0_i32 = arith.constant 0 : i32
    %c0_i32_0 = arith.constant 0 : i32
    %c0_i32_1 = arith.constant 0 : i32
    return %c0_i32, %c0_i32_0 : i32, i32
  }
  func.func @transform_4(%arg0: i32) -> (i32, i32) {
    %c0_i32 = arith.constant 0 : i32
    %c0_i32_0 = arith.constant 0 : i32
    %c0_i32_1 = arith.constant 0 : i32
    return %c0_i32, %c0_i32_0 : i32, i32
  }
  func.func @transform_5(%arg0: i32) -> (i32, i32) {
    %c0_i32 = arith.constant 0 : i32
    %c0_i32_0 = arith.constant 0 : i32
    %c0_i32_1 = arith.constant 0 : i32
    return %c0_i32, %c0_i32_0 : i32, i32
  }
  func.func @transform_6(%arg0: i32) -> (i32, i32) {
    %c0_i32 = arith.constant 0 : i32
    %c0_i32_0 = arith.constant 0 : i32
    %c0_i32_1 = arith.constant 0 : i32
    return %c0_i32, %c0_i32_0 : i32, i32
  }
  func.func @transform_7(%arg0: i32) -> (i32, i32) {
    %c0_i32 = arith.constant 0 : i32
    %c0_i32_0 = arith.constant 0 : i32
    return %c0_i32, %arg0 : i32, i32
  }
}

</mosaic_0001>

<llo_original>
// kernel: tpu_custom_call.1
$region0: #{tpu_custom_call.1}
  #allocation0 [shape = 'u32[]', space=smem, size = 0x4, offset = 0x4, fixed_abs, tag = 'smem constant byte address 0x4 - core index']
  #allocation1 [shape = 'u32[144,128]{1,0:T(1,128)}', space=vmem, size = 0x12000, scoped, tag = 'internal scratch']
  %s0 = inlined_call_operand.hbm [shape: f32[6,1024], index: 0, kind: input, shape index: {}]
  %s1 = inlined_call_operand.vmem [shape: f32[6,1], index: 1, kind: input, shape index: {}]
  %s2 = inlined_call_operand.vmem [shape: f32[6,1], index: 2, kind: input, shape index: {}]
  %s3 = inlined_call_operand.vmem [shape: f32[12,1], index: 3, kind: input, shape index: {}]
  %s4 = inlined_call_operand.vmem [shape: bf16[12,54], index: 4, kind: input, shape index: {}]
  %s5 = inlined_call_operand.vmem [shape: bf16[12,108], index: 5, kind: input, shape index: {}]
  %s6 = inlined_call_operand.vmem [shape: bf16[12,6], index: 6, kind: input, shape index: {}]
  %s7 = inlined_call_operand.hbm [shape: f32[12,1024], index: 7, kind: output, shape index: {}]
  %s8 = sld [smem:[#allocation0]]
  $region65: #{tpu_custom_call.1} parent=0
    _
  %s10 = ssub.s32 1, %s8
  %s11 = scalar_select 0, %s10, %s8
  $region1: #{tpu_custom_call.1} parent=0
    #allocation2 [shape = 'u8[32768]{0}', space=vmem, size = 0x8000, scoped, tag = 'input window, operand 0']
    #allocation3 [shape = 's32[2]{0}', space=sflag, size = 0x8, scoped, tag = 'scoped memory for tpu_custom_call.1']
    #allocation4 [shape = 's32[2]{0}', space=sflag, size = 0x8, scoped, tag = 'scoped memory for tpu_custom_call.1']
    #allocation5 [shape = 'u8[65536]{0}', space=vmem, size = 0x10000, scoped, tag = 'output window, operand 0']
    %12 = vsyncpa [#allocation3], 0
    %s13 = scalar_lea.sflag [#allocation3], 1
    %14 = vsyncpa %s13, 0
    %15 = vsyncpa [#allocation4], 0
    %s16 = scalar_lea.sflag [#allocation4], 1
    %17 = vsyncpa %s16, 0
    loop: start=0, step=1, limit=4
    $region2: #{tpu_custom_call.1} parent=1 // loop_pre_header
      _
    $region3: #{tpu_custom_call.1} parent=1 // loop_header
      %s19 = sphi 0, %s23
      %p20 = scmp.ge.s32.totalorder %s19, 4
      %s29 = sphi 0, %s31
      %s32 = sphi 0, %s29
      %s33 = sphi 0, %s32
      %s49 = sphi 0, %s33
      %s53 = sphi 0, %s53
      %s55 = sphi 0, %s53
      %s56 = sphi 0, %s55
      %s70 = sphi 0, %s56
      %s74 = sphi 0, %s74
      %s76 = sphi 0, %s74
      %s77 = sphi 0, %s76
      %s91 = sphi 0, %s77
      %s95 = sphi 0, %s95
      %s97 = sphi 0, %s95
      %s98 = sphi 0, %s97
      %s112 = sphi 0, %s98
      %s116 = sphi 0, %s116
      %s118 = sphi 0, %s116
      %s119 = sphi 0, %s118
      %s133 = sphi 0, %s119
      %s137 = sphi 0, %s137
      %s139 = sphi 0, %s137
      %s140 = sphi 0, %s139
      %s154 = sphi 0, %s140
      %s158 = sphi 0, %s158
      %s160 = sphi 0, %s158
      %s161 = sphi 0, %s160
      %s175 = sphi 0, %s161
      %s181 = sphi 0, %s183
      %s184 = sphi 0, %s181
      %s185 = sphi 0, %s184
      %s201 = sphi 0, %s185
    $region4: #{tpu_custom_call.1} parent=1 // loop_header_branch
      %22 = sbr.rel (%p20) target = $region8
    $region5: #{tpu_custom_call.1} parent=1 // loop_body
      %s24 = ssub.s32 %s19, 1
      %s25 = ssub.s32 %s19, 2
      %s26 = sadd.s32 %s19, 1
      %s27 = ssub.s32 %s19, %s26
      %p28 = scmp.eq.s32.totalorder %s27, 0
      %s30 = sadd.s32 %s29, 1
      %s31 = scalar_select %p28, %s29, %s30
      %p34 = pneg %p28
      %p35 = scmp.eq.s32.totalorder %s19, 1
      %p36 = por %p34, %p35
      %p37 = scmp.ne.s32.totalorder %s29, %s32
      %p38 = scmp.eq.s32.totalorder %s19, 0
      %p39 = por %p37, %p38
      %p40 = scmp.ne.s32.totalorder %s29, %s32
      %p41 = scmp.eq.s32.totalorder %s24, 1
      %p42 = por %p40, %p41
      %p43 = scmp.ne.s32.totalorder %s32, %s33
      %p44 = scmp.eq.s32.totalorder %s24, 0
      %p45 = por %p43, %p44
      %p46 = scmp.ne.s32.totalorder %s32, %s33
      %p47 = scmp.eq.s32.totalorder %s25, 1
      %p48 = por %p46, %p47
      %p50 = scmp.ne.s32.totalorder %s33, %s49
      %p51 = scmp.eq.s32.totalorder %s25, 0
      %p52 = por %p50, %p51
      %s54 = sadd.s32 %s53, 1
      %p57 = scmp.eq.s32.totalorder %s19, 1
      %p58 = scmp.ne.s32.totalorder %s53, %s55
      %p59 = scmp.eq.s32.totalorder %s19, 0
      %p60 = por %p58, %p59
      %p61 = scmp.ne.s32.totalorder %s53, %s55
      %p62 = scmp.eq.s32.totalorder %s24, 1
      %p63 = por %p61, %p62
      %p64 = scmp.ne.s32.totalorder %s55, %s56
      %p65 = scmp.eq.s32.totalorder %s24, 0
      %p66 = por %p64, %p65
      %p67 = scmp.ne.s32.totalorder %s55, %s56
      %p68 = scmp.eq.s32.totalorder %s25, 1
      %p69 = por %p67, %p68
      %p71 = scmp.ne.s32.totalorder %s56, %s70
      %p72 = scmp.eq.s32.totalorder %s25, 0
      %p73 = por %p71, %p72
      %s75 = sadd.s32 %s74, 1
      %p78 = scmp.eq.s32.totalorder %s19, 1
      %p79 = scmp.ne.s32.totalorder %s74, %s76
      %p80 = scmp.eq.s32.totalorder %s19, 0
      %p81 = por %p79, %p80
      %p82 = scmp.ne.s32.totalorder %s74, %s76
      %p83 = scmp.eq.s32.totalorder %s24, 1
      %p84 = por %p82, %p83
      %p85 = scmp.ne.s32.totalorder %s76, %s77
      %p86 = scmp.eq.s32.totalorder %s24, 0
      %p87 = por %p85, %p86
      %p88 = scmp.ne.s32.totalorder %s76, %s77
      %p89 = scmp.eq.s32.totalorder %s25, 1
      %p90 = por %p88, %p89
      %p92 = scmp.ne.s32.totalorder %s77, %s91
      %p93 = scmp.eq.s32.totalorder %s25, 0
      %p94 = por %p92, %p93
      %s96 = sadd.s32 %s95, 1
      %p99 = scmp.eq.s32.totalorder %s19, 1
      %p100 = scmp.ne.s32.totalorder %s95, %s97
      %p101 = scmp.eq.s32.totalorder %s19, 0
      %p102 = por %p100, %p101
      %p103 = scmp.ne.s32.totalorder %s95, %s97
      %p104 = scmp.eq.s32.totalorder %s24, 1
      %p105 = por %p103, %p104
      %p106 = scmp.ne.s32.totalorder %s97, %s98
      %p107 = scmp.eq.s32.totalorder %s24, 0
      %p108 = por %p106, %p107
      %p109 = scmp.ne.s32.totalorder %s97, %s98
      %p110 = scmp.eq.s32.totalorder %s25, 1
      %p111 = por %p109, %p110
      %p113 = scmp.ne.s32.totalorder %s98, %s112
      %p114 = scmp.eq.s32.totalorder %s25, 0
      %p115 = por %p113, %p114
      %s117 = sadd.s32 %s116, 1
      %p120 = scmp.eq.s32.totalorder %s19, 1
      %p121 = scmp.ne.s32.totalorder %s116, %s118
      %p122 = scmp.eq.s32.totalorder %s19, 0
      %p123 = por %p121, %p122
      %p124 = scmp.ne.s32.totalorder %s116, %s118
      %p125 = scmp.eq.s32.totalorder %s24, 1
      %p126 = por %p124, %p125
      %p127 = scmp.ne.s32.totalorder %s118, %s119
      %p128 = scmp.eq.s32.totalorder %s24, 0
      %p129 = por %p127, %p128
      %p130 = scmp.ne.s32.totalorder %s118, %s119
      %p131 = scmp.eq.s32.totalorder %s25, 1
      %p132 = por %p130, %p131
      %p134 = scmp.ne.s32.totalorder %s119, %s133
      %p135 = scmp.eq.s32.totalorder %s25, 0
      %p136 = por %p134, %p135
      %s138 = sadd.s32 %s137, 1
      %p141 = scmp.eq.s32.totalorder %s19, 1
      %p142 = scmp.ne.s32.totalorder %s137, %s139
      %p143 = scmp.eq.s32.totalorder %s19, 0
      %p144 = por %p142, %p143
      %p145 = scmp.ne.s32.totalorder %s137, %s139
      %p146 = scmp.eq.s32.totalorder %s24, 1
      %p147 = por %p145, %p146
      %p148 = scmp.ne.s32.totalorder %s139, %s140
      %p149 = scmp.eq.s32.totalorder %s24, 0
      %p150 = por %p148, %p149
      %p151 = scmp.ne.s32.totalorder %s139, %s140
      %p152 = scmp.eq.s32.totalorder %s25, 1
      %p153 = por %p151, %p152
      %p155 = scmp.ne.s32.totalorder %s140, %s154
      %p156 = scmp.eq.s32.totalorder %s25, 0
      %p157 = por %p155, %p156
      %s159 = sadd.s32 %s158, 1
      %p162 = scmp.eq.s32.totalorder %s19, 1
      %p163 = scmp.ne.s32.totalorder %s158, %s160
      %p164 = scmp.eq.s32.totalorder %s19, 0
      %p165 = por %p163, %p164
      %p166 = scmp.ne.s32.totalorder %s158, %s160
      %p167 = scmp.eq.s32.totalorder %s24, 1
      %p168 = por %p166, %p167
      %p169 = scmp.ne.s32.totalorder %s160, %s161
      %p170 = scmp.eq.s32.totalorder %s24, 0
      %p171 = por %p169, %p170
      %p172 = scmp.ne.s32.totalorder %s160, %s161
      %p173 = scmp.eq.s32.totalorder %s25, 1
      %p174 = por %p172, %p173
      %p176 = scmp.ne.s32.totalorder %s161, %s175
      %p177 = scmp.eq.s32.totalorder %s25, 0
      %p178 = por %p176, %p177
      %s179 = ssub.s32 %s19, %s26
      %p180 = scmp.eq.s32.totalorder %s179, 0
      %s182 = sadd.s32 %s181, 1
      %s183 = scalar_select %p180, %s181, %s182
      %p186 = pneg %p180
      %p187 = scmp.eq.s32.totalorder %s19, 1
      %p188 = por %p186, %p187
      %p189 = scmp.ne.s32.totalorder %s181, %s184
      %p190 = scmp.eq.s32.totalorder %s19, 0
      %p191 = por %p189, %p190
      %p192 = scmp.ne.s32.totalorder %s181, %s184
      %p193 = scmp.eq.s32.totalorder %s24, 1
      %p194 = por %p192, %p193
      %p195 = scmp.ne.s32.totalorder %s184, %s185
      %p196 = scmp.eq.s32.totalorder %s24, 0
      %p197 = por %p195, %p196
      %p198 = scmp.ne.s32.totalorder %s184, %s185
      %p199 = scmp.eq.s32.totalorder %s25, 1
      %p200 = por %p198, %p199
      %p202 = scmp.ne.s32.totalorder %s185, %s201
      %p203 = scmp.eq.s32.totalorder %s25, 0
      %p204 = por %p202, %p203
      %p205 = scmp.le.s32.totalorder 1, %s19
      %p206 = scmp.lt.s32.totalorder %s19, 3
      %p207 = pnand %p205, %p206
      %p208 = pneg %p207
      // Predicated region
      $region9: #{tpu_custom_call.1} parent=5 // pred_check
        _
      $region10: #{tpu_custom_call.1} parent=5 // pred_check_branch
        %210 = sbr.rel (%p207) target = $region12
      $region11: #{tpu_custom_call.1} parent=5 // pred_region
        %s211 = ssub.s32 %s19, 1
        // Predicated region
        $region13: #{tpu_custom_call.1} parent=11 // pred_check
          %p212 = pneg %p66
        $region14: #{tpu_custom_call.1} parent=11 // pred_check_branch
          %214 = sbr.rel (%p212) target = $region16
        $region15: #{tpu_custom_call.1} parent=11 // pred_region
          _
        $region16: #{tpu_custom_call.1} parent=11 // pred_fallthru
          _
        // Predicated region
        $region17: #{tpu_custom_call.1} parent=11 // pred_check
          %p215 = pneg %p87
        $region18: #{tpu_custom_call.1} parent=11 // pred_check_branch
          %217 = sbr.rel (%p215) target = $region20
        $region19: #{tpu_custom_call.1} parent=11 // pred_region
          _
        $region20: #{tpu_custom_call.1} parent=11 // pred_fallthru
          _
        // Predicated region
        $region21: #{tpu_custom_call.1} parent=11 // pred_check
          %p218 = pneg %p108
        $region22: #{tpu_custom_call.1} parent=11 // pred_check_branch
          %220 = sbr.rel (%p218) target = $region24
        $region23: #{tpu_custom_call.1} parent=11 // pred_region
          _
        $region24: #{tpu_custom_call.1} parent=11 // pred_fallthru
          _
        // Predicated region
        $region25: #{tpu_custom_call.1} parent=11 // pred_check
          %p221 = pneg %p129
        $region26: #{tpu_custom_call.1} parent=11 // pred_check_branch
          %223 = sbr.rel (%p221) target = $region28
        $region27: #{tpu_custom_call.1} parent=11 // pred_region
          _
        $region28: #{tpu_custom_call.1} parent=11 // pred_fallthru
          _
        // Predicated region
        $region29: #{tpu_custom_call.1} parent=11 // pred_check
          %p224 = pneg %p150
        $region30: #{tpu_custom_call.1} parent=11 // pred_check_branch
          %226 = sbr.rel (%p224) target = $region32
        $region31: #{tpu_custom_call.1} parent=11 // pred_region
          _
        $region32: #{tpu_custom_call.1} parent=11 // pred_fallthru
          _
        // Predicated region
        $region33: #{tpu_custom_call.1} parent=11 // pred_check
          %p227 = pneg %p171
        $region34: #{tpu_custom_call.1} parent=11 // pred_check_branch
          %229 = sbr.rel (%p227) target = $region36
        $region35: #{tpu_custom_call.1} parent=11 // pred_region
          _
        $region36: #{tpu_custom_call.1} parent=11 // pred_fallthru
          _
      $region12: #{tpu_custom_call.1} parent=5 // pred_fallthru
        _
      %p230 = scmp.lt.s32.totalorder %s19, 2
      // Predicated region
      $region37: #{tpu_custom_call.1} parent=5 // pred_check
        %p231 = pneg %p230
      $region38: #{tpu_custom_call.1} parent=5 // pred_check_branch
        %233 = sbr.rel (%p231) target = $region40
      $region39: #{tpu_custom_call.1} parent=5 // pred_region
        // Predicated region
        $region41: #{tpu_custom_call.1} parent=39 // pred_check
          %p234 = pneg %p39
        $region42: #{tpu_custom_call.1} parent=39 // pred_check_branch
          %236 = sbr.rel (%p234) target = $region44
        $region43: #{tpu_custom_call.1} parent=39 // pred_region
          %s237 = sand.u32 %s29, 1
          %s238 = scalar_lea.sflag [#allocation3], %s237
          %s239 = sand.u32 %s29, 1
          %s240 = smul.addr %s239, 32
          %s241 = scalar_lea.vmem [#allocation2], %s240
          %s242 = smul.u32 4, %s19
          %s244 = ssub.s32 512, 512
          %245 = vsyncadd %s238, %s244
          %s246 = smul.addr %s242, 128
          %s247 = scalar_lea.hbm %s0, %s246
          %s249 = sshll.u32 %s241, 4
          %s250 = int_to_ptr.vmem [resolvable:$true] %s249
          %252 = dma.hbm_to_vmem [thread:$0]  %s247, 512, %s250, %s238
        $region44: #{tpu_custom_call.1} parent=39 // pred_fallthru
          _
      $region40: #{tpu_custom_call.1} parent=5 // pred_fallthru
        _
      %p253 = scmp.le.s32.totalorder 1, %s19
      %p254 = scmp.lt.s32.totalorder %s19, 3
      %p255 = pnand %p253, %p254
      %p256 = pneg %p255
      // Predicated region
      $region45: #{tpu_custom_call.1} parent=5 // pred_check
        _
      $region46: #{tpu_custom_call.1} parent=5 // pred_check_branch
        %258 = sbr.rel (%p255) target = $region48
      $region47: #{tpu_custom_call.1} parent=5 // pred_region
        %s259 = ssub.s32 %s19, 1
        %s260 = sand.u32 %s32, 1
        %s261 = scalar_lea.sflag [#allocation3], %s260
        %s262 = sand.u32 %s32, 1
        %s263 = smul.addr %s262, 32
        %s264 = scalar_lea.vmem [#allocation2], %s263
        // Predicated region
        $region49: #{tpu_custom_call.1} parent=47 // pred_check
          %p265 = pneg %p45
        $region50: #{tpu_custom_call.1} parent=47 // pred_check_branch
          %267 = sbr.rel (%p265) target = $region52
        $region51: #{tpu_custom_call.1} parent=47 // pred_region
          %268 = dma.done %s261, 512
        $region52: #{tpu_custom_call.1} parent=47 // pred_fallthru
          _
        %s269 = sand.u32 %s32, 1
        %s270 = scalar_lea.sflag [#allocation3], %s269
        %s271 = sand.u32 %s32, 1
        %s272 = smul.addr %s271, 32
        %s273 = scalar_lea.vmem [#allocation2], %s272
        %p274 = pneg %p45
        %p275 = pneg %p42
        %p276 = pneg %p66
        %p277 = pneg %p63
        %p278 = pneg %p87
        %p279 = pneg %p84
        %p280 = pneg %p108
        %p281 = pneg %p105
        %p282 = pneg %p129
        %p283 = pneg %p126
        %p284 = pneg %p150
        %p285 = pneg %p147
        %p286 = pneg %p171
        %p287 = pneg %p168
        %p288 = pneg %p197
        %p289 = pneg %p194
        %s290 = sand.u32 %s184, 1
        %s291 = scalar_lea.sflag [#allocation4], %s290
        %s292 = sand.u32 %s184, 1
        %s293 = smul.addr %s292, 64
        %s294 = scalar_lea.vmem [#allocation5], %s293
        %s295 = smul.u32 4, %s24
        %s296 = smul.u32 4, %s24
        %v298 = vld [vmem:[%s264] sm:$0x3f]
        %v299 = vld [vmem:[%s264 + $0x8] sm:$0x3f]
        %v300 = vld [vmem:[%s264 + $0x10] sm:$0x3f]
        %v301 = vld [vmem:[%s264 + $0x18] sm:$0x3f]
        %v302 = vld [vmem:[%s1] sm:$0x3f]
        %304 = vset.pattern.permute.xlu0 0
        %305 = vperm.xlu0 %304, %v302
        %v306 = vpop.permute.xlu0 %305
        %v308 = vmul.f32 %v298, %v306
        %v309 = vmul.f32 %v299, %v306
        %v310 = vmul.f32 %v300, %v306
        %v311 = vmul.f32 %v301, %v306
        %v312 = vld [vmem:[%s2] sm:$0x3f]
        %314 = vset.pattern.permute.xlu0 0
        %315 = vperm.xlu0 %314, %v312
        %v316 = vpop.permute.xlu0 %315
        %v318 = vadd.f32 %v308, %v316
        %v319 = vadd.f32 %v309, %v316
        %v320 = vadd.f32 %v310, %v316
        %v321 = vadd.f32 %v311, %v316
        %v322 = vmax.f32 %v318, 0.0
        %v323 = vmax.f32 %v319, 0.0
        %v324 = vmax.f32 %v320, 0.0
        %v325 = vmax.f32 %v321, 0.0
        %v326 = vlaneseq
        %v327 = vand.u32 %v326, 127
        %v328 = vadd.s32 %v327, 128
        %v329 = vadd.s32 %v327, 256
        %v330 = vadd.s32 %v327, 384
        %vm331 = vcmp.lt.s32.totalorder %v327, 0
        %v332 = vsub.s32 0, %v327
        %v333 = vsel %vm331, %v332, %v327
        %v334 = vshrl.u32 %v333, 8
        %v335 = vand.u32 %v333, 255
        %v336 = vsub.s32 0, %v335
        %v337 = vsel %vm331, %v336, %v335
        %vm338 = vcmp.lt.s32.totalorder %v328, 0
        %v339 = vsub.s32 0, %v328
        %v340 = vsel %vm338, %v339, %v328
        %v341 = vshrl.u32 %v340, 8
        %v342 = vand.u32 %v340, 255
        %v343 = vsub.s32 0, %v342
        %v344 = vsel %vm338, %v343, %v342
        %vm345 = vcmp.lt.s32.totalorder %v329, 0
        %v346 = vsub.s32 0, %v329
        %v347 = vsel %vm345, %v346, %v329
        %v348 = vshrl.u32 %v347, 8
        %v349 = vand.u32 %v347, 255
        %v350 = vsub.s32 0, %v349
        %v351 = vsel %vm345, %v350, %v349
        %vm352 = vcmp.lt.s32.totalorder %v330, 0
        %v353 = vsub.s32 0, %v330
        %v354 = vsel %vm352, %v353, %v330
        %v355 = vshrl.u32 %v354, 8
        %v356 = vand.u32 %v354, 255
        %v357 = vsub.s32 0, %v356
        %v358 = vsel %vm352, %v357, %v356
        %vm359 = vcmp.ne.s32.totalorder %v337, 0
        %vm360 = vcmp.ne.s32.totalorder %v344, 0
        %vm361 = vcmp.ne.s32.totalorder %v351, 0
        %vm362 = vcmp.ne.s32.totalorder %v358, 0
        %vm363 = vcmp.lt.s32.totalorder %v337, 0
        %vm364 = vcmp.lt.s32.totalorder %v344, 0
        %vm365 = vcmp.lt.s32.totalorder %v351, 0
        %vm366 = vcmp.lt.s32.totalorder %v358, 0
        %vm367 = vmand %vm363, %vm359
        %vm368 = vmand %vm364, %vm360
        %vm369 = vmand %vm365, %vm361
        %vm370 = vmand %vm366, %vm362
        %v371 = vadd.s32 %v337, 256
        %v372 = vadd.s32 %v344, 256
        %v373 = vadd.s32 %v351, 256
        %v374 = vadd.s32 %v358, 256
        %v375 = vsel %vm367, %v371, %v337
        %v376 = vsel %vm368, %v372, %v344
        %v377 = vsel %vm369, %v373, %v351
        %v378 = vsel %vm370, %v374, %v358
        %vm379 = vcmp.lt.s32.totalorder %v375, 0
        %v380 = vsub.s32 0, %v375
        %v381 = vsel %vm379, %v380, %v375
        %v382 = vshrl.u32 %v381, 4
        %v383 = vand.u32 %v381, 15
        %v384 = vsub.s32 0, %v383
        %v385 = vsel %vm379, %v384, %v383
        %vm386 = vcmp.lt.s32.totalorder %v376, 0
        %v387 = vsub.s32 0, %v376
        %v388 = vsel %vm386, %v387, %v376
        %v389 = vshrl.u32 %v388, 4
        %v390 = vand.u32 %v388, 15
        %v391 = vsub.s32 0, %v390
        %v392 = vsel %vm386, %v391, %v390
        %vm393 = vcmp.lt.s32.totalorder %v377, 0
        %v394 = vsub.s32 0, %v377
        %v395 = vsel %vm393, %v394, %v377
        %v396 = vshrl.u32 %v395, 4
        %v397 = vand.u32 %v395, 15
        %v398 = vsub.s32 0, %v397
        %v399 = vsel %vm393, %v398, %v397
        %vm400 = vcmp.lt.s32.totalorder %v378, 0
        %v401 = vsub.s32 0, %v378
        %v402 = vsel %vm400, %v401, %v378
        %v403 = vshrl.u32 %v402, 4
        %v404 = vand.u32 %v402, 15
        %v405 = vsub.s32 0, %v404
        %v406 = vsel %vm400, %v405, %v404
        %vm407 = vcmp.ne.s32.totalorder %v385, 0
        %vm408 = vcmp.ne.s32.totalorder %v392, 0
        %vm409 = vcmp.ne.s32.totalorder %v399, 0
        %vm410 = vcmp.ne.s32.totalorder %v406, 0
        %vm411 = vcmp.lt.s32.totalorder %v385, 0
        %vm412 = vcmp.lt.s32.totalorder %v392, 0
        %vm413 = vcmp.lt.s32.totalorder %v399, 0
        %vm414 = vcmp.lt.s32.totalorder %v406, 0
        %vm415 = vmand %vm411, %vm407
        %vm416 = vmand %vm412, %vm408
        %vm417 = vmand %vm413, %vm409
        %vm418 = vmand %vm414, %vm410
        %v419 = vadd.s32 %v385, 16
        %v420 = vadd.s32 %v392, 16
        %v421 = vadd.s32 %v399, 16
        %v422 = vadd.s32 %v406, 16
        %v423 = vsel %vm415, %v419, %v385
        %v424 = vsel %vm416, %v420, %v392
        %v425 = vsel %vm417, %v421, %v399
        %v426 = vsel %vm418, %v422, %v406
        %vm427 = vcmp.ge.s32.totalorder %v375, 16
        %vm428 = vcmp.ge.s32.totalorder %v376, 16
        %vm429 = vcmp.ge.s32.totalorder %v377, 16
        %vm430 = vcmp.ge.s32.totalorder %v378, 16
        %vm431 = vcmp.ne.s32.totalorder %v423, 0
        %vm432 = vcmp.ne.s32.totalorder %v424, 0
        %vm433 = vcmp.ne.s32.totalorder %v425, 0
        %vm434 = vcmp.ne.s32.totalorder %v426, 0
        %vm435 = vmand %vm427, %vm431
        %vm436 = vmand %vm428, %vm432
        %vm437 = vmand %vm429, %vm433
        %vm438 = vmand %vm430, %vm434
        %vm439 = vcmp.ne.s32.totalorder %v423, 15
        %vm440 = vcmp.ne.s32.totalorder %v424, 15
        %vm441 = vcmp.ne.s32.totalorder %v425, 15
        %vm442 = vcmp.ne.s32.totalorder %v426, 15
        %vm443 = vmand %vm427, %vm439
        %vm444 = vmand %vm428, %vm440
        %vm445 = vmand %vm429, %vm441
        %vm446 = vmand %vm430, %vm442
        %vm447 = vcmp.lt.s32.totalorder %v375, 240
        %vm448 = vcmp.lt.s32.totalorder %v376, 240
        %vm449 = vcmp.lt.s32.totalorder %v377, 240
        %vm450 = vcmp.lt.s32.totalorder %v378, 240
        %vm451 = vmand %vm447, %vm431
        %vm452 = vmand %vm448, %vm432
        %vm453 = vmand %vm449, %vm433
        %vm454 = vmand %vm450, %vm434
        %vm455 = vmand %vm447, %vm439
        %vm456 = vmand %vm448, %vm440
        %vm457 = vmand %vm449, %vm441
        %vm458 = vmand %vm450, %vm442
        %v459 = vld [vmem:[%s4] sm:$0xf]
        %v460 = vld [vmem:[%s4 + $0x4] sm:$0x3]
        %461 = vrot.lane.b32.xlu0 %v322, 17
        %v462 = vpop.permute.xlu0 %461
        %463 = vrot.lane.b32.xlu0 %v323, 17
        %v464 = vpop.permute.xlu0 %463
        %465 = vrot.lane.b32.xlu0 %v324, 17
        %v466 = vpop.permute.xlu0 %465
        %467 = vrot.lane.b32.xlu0 %v325, 17
        %v468 = vpop.permute.xlu0 %467
        %vm469 = vcmp.lt.s32.totalorder %v327, 17
        %v470 = vsel %vm469, %v466, %v468
        %v471 = vsel %vm469, %v464, %v466
        %v472 = vsel %vm469, %v462, %v464
        %v473 = vsel %vm469, %v468, %v462
        %v474 = vsel %vm435, 1, 0
        %v475 = vsel %vm436, 1, 0
        %v476 = vsel %vm437, 1, 0
        %v477 = vsel %vm438, 1, 0
        %vm478 = vcmp.eq.s32.totalorder %v474, 1
        %vm479 = vcmp.eq.s32.totalorder %v475, 1
        %vm480 = vcmp.eq.s32.totalorder %v476, 1
        %vm481 = vcmp.eq.s32.totalorder %v477, 1
        %v482 = vsel %vm478, %v473, 0.0
        %v483 = vsel %vm479, %v472, 0.0
        %v484 = vsel %vm480, %v471, 0.0
        %v485 = vsel %vm481, %v470, 0.0
        %486 = vrot.lane.b32.xlu0 %v322, 16
        %v487 = vpop.permute.xlu0 %486
        %488 = vrot.lane.b32.xlu0 %v323, 16
        %v489 = vpop.permute.xlu0 %488
        %490 = vrot.lane.b32.xlu0 %v324, 16
        %v491 = vpop.permute.xlu0 %490
        %492 = vrot.lane.b32.xlu0 %v325, 16
        %v493 = vpop.permute.xlu0 %492
        %vm494 = vcmp.lt.s32.totalorder %v327, 16
        %v495 = vsel %vm494, %v491, %v493
        %v496 = vsel %vm494, %v489, %v491
        %v497 = vsel %vm494, %v487, %v489
        %v498 = vsel %vm494, %v493, %v487
        %v499 = vsel %vm427, 1, 0
        %v500 = vsel %vm428, 1, 0
        %v501 = vsel %vm429, 1, 0
        %v502 = vsel %vm430, 1, 0
        %vm503 = vcmp.eq.s32.totalorder %v499, 1
        %vm504 = vcmp.eq.s32.totalorder %v500, 1
        %vm505 = vcmp.eq.s32.totalorder %v501, 1
        %vm506 = vcmp.eq.s32.totalorder %v502, 1
        %v507 = vsel %vm503, %v498, 0.0
        %v508 = vsel %vm504, %v497, 0.0
        %v509 = vsel %vm505, %v496, 0.0
        %v510 = vsel %vm506, %v495, 0.0
        %511 = vrot.lane.b32.xlu0 %v322, 15
        %v512 = vpop.permute.xlu0 %511
        %513 = vrot.lane.b32.xlu0 %v323, 15
        %v514 = vpop.permute.xlu0 %513
        %515 = vrot.lane.b32.xlu0 %v324, 15
        %v516 = vpop.permute.xlu0 %515
        %517 = vrot.lane.b32.xlu0 %v325, 15
        %v518 = vpop.permute.xlu0 %517
        %vm519 = vcmp.lt.s32.totalorder %v327, 15
        %v520 = vsel %vm519, %v516, %v518
        %v521 = vsel %vm519, %v514, %v516
        %v522 = vsel %vm519, %v512, %v514
        %v523 = vsel %vm519, %v518, %v512
        %v524 = vsel %vm443, 1, 0
        %v525 = vsel %vm444, 1, 0
        %v526 = vsel %vm445, 1, 0
        %v527 = vsel %vm446, 1, 0
        %vm528 = vcmp.eq.s32.totalorder %v524, 1
        %vm529 = vcmp.eq.s32.totalorder %v525, 1
        %vm530 = vcmp.eq.s32.totalorder %v526, 1
        %vm531 = vcmp.eq.s32.totalorder %v527, 1
        %v532 = vsel %vm528, %v523, 0.0
        %v533 = vsel %vm529, %v522, 0.0
        %v534 = vsel %vm530, %v521, 0.0
        %v535 = vsel %vm531, %v520, 0.0
        %536 = vrot.lane.b32.xlu0 %v322, 1
        %v537 = vpop.permute.xlu0 %536
        %538 = vrot.lane.b32.xlu0 %v323, 1
        %v539 = vpop.permute.xlu0 %538
        %540 = vrot.lane.b32.xlu0 %v324, 1
        %v541 = vpop.permute.xlu0 %540
        %542 = vrot.lane.b32.xlu0 %v325, 1
        %v543 = vpop.permute.xlu0 %542
        %vm544 = vcmp.lt.s32.totalorder %v327, 1
        %v545 = vsel %vm544, %v541, %v543
        %v546 = vsel %vm544, %v539, %v541
        %v547 = vsel %vm544, %v537, %v539
        %v548 = vsel %vm544, %v543, %v537
        %v549 = vsel %vm431, 1, 0
        %v550 = vsel %vm432, 1, 0
        %v551 = vsel %vm433, 1, 0
        %v552 = vsel %vm434, 1, 0
        %vm553 = vcmp.eq.s32.totalorder %v549, 1
        %vm554 = vcmp.eq.s32.totalorder %v550, 1
        %vm555 = vcmp.eq.s32.totalorder %v551, 1
        %vm556 = vcmp.eq.s32.totalorder %v552, 1
        %v557 = vsel %vm553, %v548, 0.0
        %v558 = vsel %vm554, %v547, 0.0
        %v559 = vsel %vm555, %v546, 0.0
        %v560 = vsel %vm556, %v545, 0.0
        %561 = vrot.lane.b32.xlu0 %v322, 127
        %v562 = vpop.permute.xlu0 %561
        %563 = vrot.lane.b32.xlu0 %v323, 127
        %v564 = vpop.permute.xlu0 %563
        %565 = vrot.lane.b32.xlu0 %v324, 127
        %v566 = vpop.permute.xlu0 %565
        %567 = vrot.lane.b32.xlu0 %v325, 127
        %v568 = vpop.permute.xlu0 %567
        %vm569 = vcmp.lt.s32.totalorder %v327, 127
        %v570 = vsel %vm569, %v566, %v568
        %v571 = vsel %vm569, %v564, %v566
        %v572 = vsel %vm569, %v562, %v564
        %v573 = vsel %vm569, %v568, %v562
        %v574 = vsel %vm439, 1, 0
        %v575 = vsel %vm440, 1, 0
        %v576 = vsel %vm441, 1, 0
        %v577 = vsel %vm442, 1, 0
        %vm578 = vcmp.eq.s32.totalorder %v574, 1
        %vm579 = vcmp.eq.s32.totalorder %v575, 1
        %vm580 = vcmp.eq.s32.totalorder %v576, 1
        %vm581 = vcmp.eq.s32.totalorder %v577, 1
        %v582 = vsel %vm578, %v572, 0.0
        %v583 = vsel %vm579, %v571, 0.0
        %v584 = vsel %vm580, %v570, 0.0
        %v585 = vsel %vm581, %v573, 0.0
        %586 = vrot.lane.b32.xlu0 %v322, 113
        %v587 = vpop.permute.xlu0 %586
        %588 = vrot.lane.b32.xlu0 %v323, 113
        %v589 = vpop.permute.xlu0 %588
        %590 = vrot.lane.b32.xlu0 %v324, 113
        %v591 = vpop.permute.xlu0 %590
        %592 = vrot.lane.b32.xlu0 %v325, 113
        %v593 = vpop.permute.xlu0 %592
        %vm594 = vcmp.lt.s32.totalorder %v327, 113
        %v595 = vsel %vm594, %v591, %v593
        %v596 = vsel %vm594, %v589, %v591
        %v597 = vsel %vm594, %v587, %v589
        %v598 = vsel %vm594, %v593, %v587
        %v599 = vsel %vm451, 1, 0
        %v600 = vsel %vm452, 1, 0
        %v601 = vsel %vm453, 1, 0
        %v602 = vsel %vm454, 1, 0
        %vm603 = vcmp.eq.s32.totalorder %v599, 1
        %vm604 = vcmp.eq.s32.totalorder %v600, 1
        %vm605 = vcmp.eq.s32.totalorder %v601, 1
        %vm606 = vcmp.eq.s32.totalorder %v602, 1
        %v607 = vsel %vm603, %v597, 0.0
        %v608 = vsel %vm604, %v596, 0.0
        %v609 = vsel %vm605, %v595, 0.0
        %v610 = vsel %vm606, %v598, 0.0
        %611 = vrot.lane.b32.xlu0 %v322, 112
        %v612 = vpop.permute.xlu0 %611
        %613 = vrot.lane.b32.xlu0 %v323, 112
        %v614 = vpop.permute.xlu0 %613
        %615 = vrot.lane.b32.xlu0 %v324, 112
        %v616 = vpop.permute.xlu0 %615
        %617 = vrot.lane.b32.xlu0 %v325, 112
        %v618 = vpop.permute.xlu0 %617
        %vm619 = vcmp.lt.s32.totalorder %v327, 112
        %v620 = vsel %vm619, %v616, %v618
        %v621 = vsel %vm619, %v614, %v616
        %v622 = vsel %vm619, %v612, %v614
        %v623 = vsel %vm619, %v618, %v612
        %v624 = vsel %vm447, 1, 0
        %v625 = vsel %vm448, 1, 0
        %v626 = vsel %vm449, 1, 0
        %v627 = vsel %vm450, 1, 0
        %vm628 = vcmp.eq.s32.totalorder %v624, 1
        %vm629 = vcmp.eq.s32.totalorder %v625, 1
        %vm630 = vcmp.eq.s32.totalorder %v626, 1
        %vm631 = vcmp.eq.s32.totalorder %v627, 1
        %v632 = vsel %vm628, %v622, 0.0
        %v633 = vsel %vm629, %v621, 0.0
        %v634 = vsel %vm630, %v620, 0.0
        %v635 = vsel %vm631, %v623, 0.0
        %636 = vrot.lane.b32.xlu0 %v322, 111
        %v637 = vpop.permute.xlu0 %636
        %638 = vrot.lane.b32.xlu0 %v323, 111
        %v639 = vpop.permute.xlu0 %638
        %640 = vrot.lane.b32.xlu0 %v324, 111
        %v641 = vpop.permute.xlu0 %640
        %642 = vrot.lane.b32.xlu0 %v325, 111
        %v643 = vpop.permute.xlu0 %642
        %vm644 = vcmp.lt.s32.totalorder %v327, 111
        %v645 = vsel %vm644, %v641, %v643
        %v646 = vsel %vm644, %v639, %v641
        %v647 = vsel %vm644, %v637, %v639
        %v648 = vsel %vm644, %v643, %v637
        %v649 = vsel %vm455, 1, 0
        %v650 = vsel %vm456, 1, 0
        %v651 = vsel %vm457, 1, 0
        %v652 = vsel %vm458, 1, 0
        %vm653 = vcmp.eq.s32.totalorder %v649, 1
        %vm654 = vcmp.eq.s32.totalorder %v650, 1
        %vm655 = vcmp.eq.s32.totalorder %v651, 1
        %vm656 = vcmp.eq.s32.totalorder %v652, 1
        %v657 = vsel %vm653, %v647, 0.0
        %v658 = vsel %vm654, %v646, 0.0
        %v659 = vsel %vm655, %v645, 0.0
        %v660 = vsel %vm656, %v648, 0.0
        %v665 = vrot.slane %v507, 2
        %v666 = vrot.slane %v508, 2
        %v667 = vrot.slane %v509, 2
        %v668 = vrot.slane %v510, 2
        %v677 = vrot.slane %v532, 4
        %v678 = vrot.slane %v533, 4
        %v679 = vrot.slane %v534, 4
        %v680 = vrot.slane %v535, 4
        %v689 = vrot.slane %v557, 6
        %v690 = vrot.slane %v558, 6
        %v691 = vrot.slane %v559, 6
        %v692 = vrot.slane %v560, 6
        %v701 = vrot.slane %v582, 2
        %v702 = vrot.slane %v583, 2
        %v703 = vrot.slane %v584, 2
        %v704 = vrot.slane %v585, 2
        %v713 = vrot.slane %v607, 4
        %v714 = vrot.slane %v608, 4
        %v715 = vrot.slane %v609, 4
        %v716 = vrot.slane %v610, 4
        %v725 = vrot.slane %v632, 6
        %v726 = vrot.slane %v633, 6
        %v727 = vrot.slane %v634, 6
        %v728 = vrot.slane %v635, 6
        %vm733 = vcmask 1045504
        %v734 = vsel %vm733, %v482, %v665
        %v735 = vsel %vm733, %v483, %v666
        %v736 = vsel %vm733, %v484, %v667
        %v737 = vsel %vm733, %v485, %v668
        %vm738 = vcmask 1043456
        %v739 = vsel %vm738, %v665, %v677
        %v740 = vsel %vm738, %v666, %v678
        %v741 = vsel %vm738, %v667, %v679
        %v742 = vsel %vm738, %v668, %v680
        %vm743 = vcmask 1041408
        %v744 = vsel %vm743, %v677, %v689
        %v745 = vsel %vm743, %v678, %v690
        %v746 = vsel %vm743, %v679, %v691
        %v747 = vsel %vm743, %v680, %v692
        %v748 = vsel %vm733, %v322, %v701
        %v749 = vsel %vm733, %v323, %v702
        %v750 = vsel %vm733, %v324, %v703
        %v751 = vsel %vm733, %v325, %v704
        %v752 = vsel %vm738, %v701, %v713
        %v753 = vsel %vm738, %v702, %v714
        %v754 = vsel %vm738, %v703, %v715
        %v755 = vsel %vm738, %v704, %v716
        %v756 = vsel %vm743, %v713, %v725
        %v757 = vsel %vm743, %v714, %v726
        %v758 = vsel %vm743, %v715, %v727
        %v759 = vsel %vm743, %v716, %v728
        %v760 = vpack.c.bf16 %v739, %v734
        %v761 = vpack.c.bf16 %v740, %v735
        %v762 = vpack.c.bf16 %v741, %v736
        %v763 = vpack.c.bf16 %v742, %v737
        %v764 = vpack.c.bf16 %v748, %v744
        %v765 = vpack.c.bf16 %v749, %v745
        %v766 = vpack.c.bf16 %v750, %v746
        %v767 = vpack.c.bf16 %v751, %v747
        %v768 = vpack.c.bf16 %v756, %v752
        %v769 = vpack.c.bf16 %v757, %v753
        %v770 = vpack.c.bf16 %v758, %v754
        %v771 = vpack.c.bf16 %v759, %v755
        %v772 = vpack.c.bf16 %v657, %v657
        %v773 = vpack.c.bf16 %v658, %v658
        %v774 = vpack.c.bf16 %v659, %v659
        %v775 = vpack.c.bf16 %v660, %v660
        %v776 = vld [vmem:[%s3] sm:$0xff]
        %v777 = vld [vmem:[%s3 + $0x8] sm:$0xf]
        %779 = vset.pattern.permute.xlu0 0
        %780 = vperm.xlu0 %779, %v776
        %v781 = vpop.permute.xlu0 %780
        %784 = vset.pattern.permute.xlu0 0
        %785 = vperm.xlu0 %784, %v777
        %v786 = vpop.permute.xlu0 %785
        %v790 = vunpack.c.l.b16 %v459
        %v791 = vunpack.c.l.b16 %v460
        %v792 = vpack.c.b16 %v791, %v790
        %vm793 = vcmask 441344
        %v795 = vsel %vm793, %v792, 0
        %vm797 = vcmask 1042432
        %v799 = vsel %vm797, %v772, 0
        %v802 = vsel %vm797, %v773, 0
        %v805 = vsel %vm797, %v774, 0
        %v808 = vsel %vm797, %v775, 0
        %810 = vmatprep.subr.bf16.mxu0 0
        %811 = vmatpush1.bf16.msra.mxu0 0
        %812 = vmatprep.subr.bf16.mxu0 0
        %813 = vmatpush1.bf16.msra.mxu0 0
        %814 = vmatprep.subr.bf16.mxu0 0
        %815 = vmatpush1.bf16.msra.mxu0 0
        %816 = vmatprep.subr.bf16.mxu0 0
        %817 = vmatpush1.bf16.msra.mxu0 0
        %818 = vmatprep.subr.bf16.mxu0 %v802
        %819 = vmatpush1.bf16.msra.mxu0 %v799
        %820 = vmatprep.subr.bf16.mxu0 %v769
        %821 = vmatpush1.bf16.msra.mxu0 %v768
        %822 = vmatprep.subr.bf16.mxu0 %v765
        %823 = vmatpush1.bf16.msra.mxu0 %v764
        %824 = vmatprep.subr.bf16.mxu0 %v761
        %825 = vmatpush1.bf16.msra.mxu0 %v760
        %826 = vmatprep.subr.bf16.mxu0 0
        %827 = vmatpush2.bf16.msra.mxu0 0
        %828 = vmatprep.subr.bf16.mxu0 0
        %829 = vmatpush2.bf16.msra.mxu0 0
        %830 = vmatprep.subr.bf16.mxu0 0
        %831 = vmatpush2.bf16.msra.mxu0 0
        %832 = vmatprep.subr.bf16.mxu0 0
        %833 = vmatpush2.bf16.msra.mxu0 0
        %834 = vmatprep.subr.bf16.mxu0 0
        %835 = vmatpush2.bf16.msra.mxu0 0
        %836 = vmatprep.subr.bf16.mxu0 0
        %837 = vmatpush2.bf16.msra.mxu0 0
        %838 = vmatprep.subr.bf16.mxu0 0
        %839 = vmatpush2.bf16.msra.mxu0 0
        %840 = vmatprep.subr.bf16.mxu0 0
        %841 = vmatpush2.bf16.msra.mxu0 0
        %842 = vmatprep.mubr.bf16.mxu0 0
        %843 = vmatmul.mubr.bf16.gmra.mxu0 %v795
        %v844 = vpop.f32.mrf.mxu0
        %v845 = vadd.f32 %v781, %v844
        %v846 = vpop.f32.mrf.mxu0
        %v847 = vadd.f32 %v781, %v846
        %v848 = vpop.f32.mrf.mxu0
        %v849 = vadd.f32 %v786, %v848
        %v850 = vpop.f32.mrf.mxu0
        %v851 = vadd.f32 %v786, %v850
        %852 = vdwg.mxu0
        %853 = vmatprep.subr.bf16.mxu0 0
        %854 = vmatpush1.bf16.msra.mxu0 0
        %855 = vmatprep.subr.bf16.mxu0 0
        %856 = vmatpush1.bf16.msra.mxu0 0
        %857 = vmatprep.subr.bf16.mxu0 0
        %858 = vmatpush1.bf16.msra.mxu0 0
        %859 = vmatprep.subr.bf16.mxu0 0
        %860 = vmatpush1.bf16.msra.mxu0 0
        %861 = vmatprep.subr.bf16.mxu0 %v808
        %862 = vmatpush1.bf16.msra.mxu0 %v805
        %863 = vmatprep.subr.bf16.mxu0 %v771
        %864 = vmatpush1.bf16.msra.mxu0 %v770
        %865 = vmatprep.subr.bf16.mxu0 %v767
        %866 = vmatpush1.bf16.msra.mxu0 %v766
        %867 = vmatprep.subr.bf16.mxu0 %v763
        %868 = vmatpush1.bf16.msra.mxu0 %v762
        %869 = vmatprep.subr.bf16.mxu0 0
        %870 = vmatpush2.bf16.msra.mxu0 0
        %871 = vmatprep.subr.bf16.mxu0 0
        %872 = vmatpush2.bf16.msra.mxu0 0
        %873 = vmatprep.subr.bf16.mxu0 0
        %874 = vmatpush2.bf16.msra.mxu0 0
        %875 = vmatprep.subr.bf16.mxu0 0
        %876 = vmatpush2.bf16.msra.mxu0 0
        %877 = vmatprep.subr.bf16.mxu0 0
        %878 = vmatpush2.bf16.msra.mxu0 0
        %879 = vmatprep.subr.bf16.mxu0 0
        %880 = vmatpush2.bf16.msra.mxu0 0
        %881 = vmatprep.subr.bf16.mxu0 0
        %882 = vmatpush2.bf16.msra.mxu0 0
        %883 = vmatprep.subr.bf16.mxu0 0
        %884 = vmatpush2.bf16.msra.mxu0 0
        %885 = vmatprep.mubr.bf16.mxu0 0
        %886 = vmatmul.mubr.bf16.gmra.mxu0 %v795
        %v887 = vpop.f32.mrf.mxu0
        %v888 = vadd.f32 %v781, %v887
        %v889 = vpop.f32.mrf.mxu0
        %v890 = vadd.f32 %v781, %v889
        %v891 = vpop.f32.mrf.mxu0
        %v892 = vadd.f32 %v786, %v891
        %v893 = vpop.f32.mrf.mxu0
        %v894 = vadd.f32 %v786, %v893
        %895 = vdwg.mxu0
        %v896 = vmax.f32 %v845, 0.0
        %v897 = vmax.f32 %v847, 0.0
        %v898 = vmax.f32 %v888, 0.0
        %v899 = vmax.f32 %v890, 0.0
        %v900 = vmax.f32 %v849, 0.0
        %v901 = vmax.f32 %v851, 0.0
        %v902 = vmax.f32 %v892, 0.0
        %v903 = vmax.f32 %v894, 0.0
        %v904 = vld [vmem:[%s6] sm:$0xf]
        %v905 = vld [vmem:[%s6 + $0x4] sm:$0x3]
        %v906 = vpack.c.bf16 %v322, %v322
        %v907 = vpack.c.bf16 %v323, %v323
        %v908 = vpack.c.bf16 %v324, %v324
        %v909 = vpack.c.bf16 %v325, %v325
        %v910 = vld [vmem:[%s5] sm:$0xf]
        %v911 = vld [vmem:[%s5 + $0x4] sm:$0x3]
        %912 = vrot.lane.b32.xlu0 %v896, 17
        %v913 = vpop.permute.xlu0 %912
        %914 = vrot.lane.b32.xlu0 %v900, 17
        %v915 = vpop.permute.xlu0 %914
        %916 = vrot.lane.b32.xlu0 %v897, 17
        %v917 = vpop.permute.xlu0 %916
        %918 = vrot.lane.b32.xlu0 %v901, 17
        %v919 = vpop.permute.xlu0 %918
        %920 = vrot.lane.b32.xlu0 %v898, 17
        %v921 = vpop.permute.xlu0 %920
        %922 = vrot.lane.b32.xlu0 %v902, 17
        %v923 = vpop.permute.xlu0 %922
        %924 = vrot.lane.b32.xlu0 %v899, 17
        %v925 = vpop.permute.xlu0 %924
        %926 = vrot.lane.b32.xlu0 %v903, 17
        %v927 = vpop.permute.xlu0 %926
        %v928 = vsel %vm469, %v921, %v925
        %v929 = vsel %vm469, %v923, %v927
        %v930 = vsel %vm469, %v917, %v921
        %v931 = vsel %vm469, %v919, %v923
        %v932 = vsel %vm469, %v913, %v917
        %v933 = vsel %vm469, %v915, %v919
        %v934 = vsel %vm469, %v925, %v913
        %v935 = vsel %vm469, %v927, %v915
        %v936 = vsel %vm478, %v934, 0.0
        %v937 = vsel %vm479, %v932, 0.0
        %v938 = vsel %vm480, %v930, 0.0
        %v939 = vsel %vm481, %v928, 0.0
        %v940 = vsel %vm478, %v935, 0.0
        %v941 = vsel %vm479, %v933, 0.0
        %v942 = vsel %vm480, %v931, 0.0
        %v943 = vsel %vm481, %v929, 0.0
        %944 = vrot.lane.b32.xlu0 %v896, 16
        %v945 = vpop.permute.xlu0 %944
        %946 = vrot.lane.b32.xlu0 %v900, 16
        %v947 = vpop.permute.xlu0 %946
        %948 = vrot.lane.b32.xlu0 %v897, 16
        %v949 = vpop.permute.xlu0 %948
        %950 = vrot.lane.b32.xlu0 %v901, 16
        %v951 = vpop.permute.xlu0 %950
        %952 = vrot.lane.b32.xlu0 %v898, 16
        %v953 = vpop.permute.xlu0 %952
        %954 = vrot.lane.b32.xlu0 %v902, 16
        %v955 = vpop.permute.xlu0 %954
        %956 = vrot.lane.b32.xlu0 %v899, 16
        %v957 = vpop.permute.xlu0 %956
        %958 = vrot.lane.b32.xlu0 %v903, 16
        %v959 = vpop.permute.xlu0 %958
        %v960 = vsel %vm494, %v953, %v957
        %v961 = vsel %vm494, %v955, %v959
        %v962 = vsel %vm494, %v949, %v953
        %v963 = vsel %vm494, %v951, %v955
        %v964 = vsel %vm494, %v945, %v949
        %v965 = vsel %vm494, %v947, %v951
        %v966 = vsel %vm494, %v957, %v945
        %v967 = vsel %vm494, %v959, %v947
        %v968 = vsel %vm503, %v966, 0.0
        %v969 = vsel %vm504, %v964, 0.0
        %v970 = vsel %vm505, %v962, 0.0
        %v971 = vsel %vm506, %v960, 0.0
        %v972 = vsel %vm503, %v967, 0.0
        %v973 = vsel %vm504, %v965, 0.0
        %v974 = vsel %vm505, %v963, 0.0
        %v975 = vsel %vm506, %v961, 0.0
        %976 = vrot.lane.b32.xlu0 %v896, 15
        %v977 = vpop.permute.xlu0 %976
        %978 = vrot.lane.b32.xlu0 %v900, 15
        %v979 = vpop.permute.xlu0 %978
        %980 = vrot.lane.b32.xlu0 %v897, 15
        %v981 = vpop.permute.xlu0 %980
        %982 = vrot.lane.b32.xlu0 %v901, 15
        %v983 = vpop.permute.xlu0 %982
        %984 = vrot.lane.b32.xlu0 %v898, 15
        %v985 = vpop.permute.xlu0 %984
        %986 = vrot.lane.b32.xlu0 %v902, 15
        %v987 = vpop.permute.xlu0 %986
        %988 = vrot.lane.b32.xlu0 %v899, 15
        %v989 = vpop.permute.xlu0 %988
        %990 = vrot.lane.b32.xlu0 %v903, 15
        %v991 = vpop.permute.xlu0 %990
        %v992 = vsel %vm519, %v985, %v989
        %v993 = vsel %vm519, %v987, %v991
        %v994 = vsel %vm519, %v981, %v985
        %v995 = vsel %vm519, %v983, %v987
        %v996 = vsel %vm519, %v977, %v981
        %v997 = vsel %vm519, %v979, %v983
        %v998 = vsel %vm519, %v989, %v977
        %v999 = vsel %vm519, %v991, %v979
        %v1000 = vsel %vm528, %v998, 0.0
        %v1001 = vsel %vm529, %v996, 0.0
        %v1002 = vsel %vm530, %v994, 0.0
        %v1003 = vsel %vm531, %v992, 0.0
        %v1004 = vsel %vm528, %v999, 0.0
        %v1005 = vsel %vm529, %v997, 0.0
        %v1006 = vsel %vm530, %v995, 0.0
        %v1007 = vsel %vm531, %v993, 0.0
        %1008 = vrot.lane.b32.xlu0 %v896, 1
        %v1009 = vpop.permute.xlu0 %1008
        %1010 = vrot.lane.b32.xlu0 %v900, 1
        %v1011 = vpop.permute.xlu0 %1010
        %1012 = vrot.lane.b32.xlu0 %v897, 1
        %v1013 = vpop.permute.xlu0 %1012
        %1014 = vrot.lane.b32.xlu0 %v901, 1
        %v1015 = vpop.permute.xlu0 %1014
        %1016 = vrot.lane.b32.xlu0 %v898, 1
        %v1017 = vpop.permute.xlu0 %1016
        %1018 = vrot.lane.b32.xlu0 %v902, 1
        %v1019 = vpop.permute.xlu0 %1018
        %1020 = vrot.lane.b32.xlu0 %v899, 1
        %v1021 = vpop.permute.xlu0 %1020
        %1022 = vrot.lane.b32.xlu0 %v903, 1
        %v1023 = vpop.permute.xlu0 %1022
        %v1024 = vsel %vm544, %v1017, %v1021
        %v1025 = vsel %vm544, %v1019, %v1023
        %v1026 = vsel %vm544, %v1013, %v1017
        %v1027 = vsel %vm544, %v1015, %v1019
        %v1028 = vsel %vm544, %v1009, %v1013
        %v1029 = vsel %vm544, %v1011, %v1015
        %v1030 = vsel %vm544, %v1021, %v1009
        %v1031 = vsel %vm544, %v1023, %v1011
        %v1032 = vsel %vm553, %v1030, 0.0
        %v1033 = vsel %vm554, %v1028, 0.0
        %v1034 = vsel %vm555, %v1026, 0.0
        %v1035 = vsel %vm556, %v1024, 0.0
        %v1036 = vsel %vm553, %v1031, 0.0
        %v1037 = vsel %vm554, %v1029, 0.0
        %v1038 = vsel %vm555, %v1027, 0.0
        %v1039 = vsel %vm556, %v1025, 0.0
        %1040 = vrot.lane.b32.xlu0 %v896, 127
        %v1041 = vpop.permute.xlu0 %1040
        %1042 = vrot.lane.b32.xlu0 %v900, 127
        %v1043 = vpop.permute.xlu0 %1042
        %1044 = vrot.lane.b32.xlu0 %v897, 127
        %v1045 = vpop.permute.xlu0 %1044
        %1046 = vrot.lane.b32.xlu0 %v901, 127
        %v1047 = vpop.permute.xlu0 %1046
        %1048 = vrot.lane.b32.xlu0 %v898, 127
        %v1049 = vpop.permute.xlu0 %1048
        %1050 = vrot.lane.b32.xlu0 %v902, 127
        %v1051 = vpop.permute.xlu0 %1050
        %1052 = vrot.lane.b32.xlu0 %v899, 127
        %v1053 = vpop.permute.xlu0 %1052
        %1054 = vrot.lane.b32.xlu0 %v903, 127
        %v1055 = vpop.permute.xlu0 %1054
        %v1056 = vsel %vm569, %v1049, %v1053
        %v1057 = vsel %vm569, %v1051, %v1055
        %v1058 = vsel %vm569, %v1045, %v1049
        %v1059 = vsel %vm569, %v1047, %v1051
        %v1060 = vsel %vm569, %v1041, %v1045
        %v1061 = vsel %vm569, %v1043, %v1047
        %v1062 = vsel %vm569, %v1053, %v1041
        %v1063 = vsel %vm569, %v1055, %v1043
        %v1064 = vsel %vm578, %v1060, 0.0
        %v1065 = vsel %vm579, %v1058, 0.0
        %v1066 = vsel %vm580, %v1056, 0.0
        %v1067 = vsel %vm581, %v1062, 0.0
        %v1068 = vsel %vm578, %v1061, 0.0
        %v1069 = vsel %vm579, %v1059, 0.0
        %v1070 = vsel %vm580, %v1057, 0.0
        %v1071 = vsel %vm581, %v1063, 0.0
        %1072 = vrot.lane.b32.xlu0 %v896, 113
        %v1073 = vpop.permute.xlu0 %1072
        %1074 = vrot.lane.b32.xlu0 %v900, 113
        %v1075 = vpop.permute.xlu0 %1074
        %1076 = vrot.lane.b32.xlu0 %v897, 113
        %v1077 = vpop.permute.xlu0 %1076
        %1078 = vrot.lane.b32.xlu0 %v901, 113
        %v1079 = vpop.permute.xlu0 %1078
        %1080 = vrot.lane.b32.xlu0 %v898, 113
        %v1081 = vpop.permute.xlu0 %1080
        %1082 = vrot.lane.b32.xlu0 %v902, 113
        %v1083 = vpop.permute.xlu0 %1082
        %1084 = vrot.lane.b32.xlu0 %v899, 113
        %v1085 = vpop.permute.xlu0 %1084
        %1086 = vrot.lane.b32.xlu0 %v903, 113
        %v1087 = vpop.permute.xlu0 %1086
        %v1088 = vsel %vm594, %v1081, %v1085
        %v1089 = vsel %vm594, %v1083, %v1087
        %v1090 = vsel %vm594, %v1077, %v1081
        %v1091 = vsel %vm594, %v1079, %v1083
        %v1092 = vsel %vm594, %v1073, %v1077
        %v1093 = vsel %vm594, %v1075, %v1079
        %v1094 = vsel %vm594, %v1085, %v1073
        %v1095 = vsel %vm594, %v1087, %v1075
        %v1096 = vsel %vm603, %v1092, 0.0
        %v1097 = vsel %vm604, %v1090, 0.0
        %v1098 = vsel %vm605, %v1088, 0.0
        %v1099 = vsel %vm606, %v1094, 0.0
        %v1100 = vsel %vm603, %v1093, 0.0
        %v1101 = vsel %vm604, %v1091, 0.0
        %v1102 = vsel %vm605, %v1089, 0.0
        %v1103 = vsel %vm606, %v1095, 0.0
        %1104 = vrot.lane.b32.xlu0 %v896, 112
        %v1105 = vpop.permute.xlu0 %1104
        %1106 = vrot.lane.b32.xlu0 %v900, 112
        %v1107 = vpop.permute.xlu0 %1106
        %1108 = vrot.lane.b32.xlu0 %v897, 112
        %v1109 = vpop.permute.xlu0 %1108
        %1110 = vrot.lane.b32.xlu0 %v901, 112
        %v1111 = vpop.permute.xlu0 %1110
        %1112 = vrot.lane.b32.xlu0 %v898, 112
        %v1113 = vpop.permute.xlu0 %1112
        %1114 = vrot.lane.b32.xlu0 %v902, 112
        %v1115 = vpop.permute.xlu0 %1114
        %1116 = vrot.lane.b32.xlu0 %v899, 112
        %v1117 = vpop.permute.xlu0 %1116
        %1118 = vrot.lane.b32.xlu0 %v903, 112
        %v1119 = vpop.permute.xlu0 %1118
        %v1120 = vsel %vm619, %v1113, %v1117
        %v1121 = vsel %vm619, %v1115, %v1119
        %v1122 = vsel %vm619, %v1109, %v1113
        %v1123 = vsel %vm619, %v1111, %v1115
        %v1124 = vsel %vm619, %v1105, %v1109
        %v1125 = vsel %vm619, %v1107, %v1111
        %v1126 = vsel %vm619, %v1117, %v1105
        %v1127 = vsel %vm619, %v1119, %v1107
        %v1128 = vsel %vm628, %v1124, 0.0
        %v1129 = vsel %vm629, %v1122, 0.0
        %v1130 = vsel %vm630, %v1120, 0.0
        %v1131 = vsel %vm631, %v1126, 0.0
        %v1132 = vsel %vm628, %v1125, 0.0
        %v1133 = vsel %vm629, %v1123, 0.0
        %v1134 = vsel %vm630, %v1121, 0.0
        %v1135 = vsel %vm631, %v1127, 0.0
        %1136 = vrot.lane.b32.xlu0 %v896, 111
        %v1137 = vpop.permute.xlu0 %1136
        %1138 = vrot.lane.b32.xlu0 %v900, 111
        %v1139 = vpop.permute.xlu0 %1138
        %1140 = vrot.lane.b32.xlu0 %v897, 111
        %v1141 = vpop.permute.xlu0 %1140
        %1142 = vrot.lane.b32.xlu0 %v901, 111
        %v1143 = vpop.permute.xlu0 %1142
        %1144 = vrot.lane.b32.xlu0 %v898, 111
        %v1145 = vpop.permute.xlu0 %1144
        %1146 = vrot.lane.b32.xlu0 %v902, 111
        %v1147 = vpop.permute.xlu0 %1146
        %1148 = vrot.lane.b32.xlu0 %v899, 111
        %v1149 = vpop.permute.xlu0 %1148
        %1150 = vrot.lane.b32.xlu0 %v903, 111
        %v1151 = vpop.permute.xlu0 %1150
        %v1152 = vsel %vm644, %v1145, %v1149
        %v1153 = vsel %vm644, %v1147, %v1151
        %v1154 = vsel %vm644, %v1141, %v1145
        %v1155 = vsel %vm644, %v1143, %v1147
        %v1156 = vsel %vm644, %v1137, %v1141
        %v1157 = vsel %vm644, %v1139, %v1143
        %v1158 = vsel %vm644, %v1149, %v1137
        %v1159 = vsel %vm644, %v1151, %v1139
        %v1160 = vsel %vm653, %v1156, 0.0
        %v1161 = vsel %vm654, %v1154, 0.0
        %v1162 = vsel %vm655, %v1152, 0.0
        %v1163 = vsel %vm656, %v1158, 0.0
        %v1164 = vsel %vm653, %v1157, 0.0
        %v1165 = vsel %vm654, %v1155, 0.0
        %v1166 = vsel %vm655, %v1153, 0.0
        %v1167 = vsel %vm656, %v1159, 0.0
        %v1176 = vrot.slane %v968, 4
        %v1177 = vrot.slane %v969, 4
        %v1178 = vrot.slane %v970, 4
        %v1179 = vrot.slane %v971, 4
        %v1180 = vrot.slane %v972, 4
        %v1181 = vsel %vm738, %v1176, %v1180
        %v1182 = vrot.slane %v973, 4
        %v1183 = vsel %vm738, %v1177, %v1182
        %v1184 = vrot.slane %v974, 4
        %v1185 = vsel %vm738, %v1178, %v1184
        %v1186 = vrot.slane %v975, 4
        %v1187 = vsel %vm738, %v1179, %v1186
        %v1204 = vrot.slane %v1032, 4
        %v1205 = vrot.slane %v1033, 4
        %v1206 = vrot.slane %v1034, 4
        %v1207 = vrot.slane %v1035, 4
        %v1208 = vrot.slane %v1036, 4
        %v1209 = vsel %vm738, %v1204, %v1208
        %v1210 = vrot.slane %v1037, 4
        %v1211 = vsel %vm738, %v1205, %v1210
        %v1212 = vrot.slane %v1038, 4
        %v1213 = vsel %vm738, %v1206, %v1212
        %v1214 = vrot.slane %v1039, 4
        %v1215 = vsel %vm738, %v1207, %v1214
        %v1232 = vrot.slane %v1064, 4
        %v1233 = vrot.slane %v1065, 4
        %v1234 = vrot.slane %v1066, 4
        %v1235 = vrot.slane %v1067, 4
        %v1236 = vrot.slane %v1068, 4
        %v1237 = vsel %vm738, %v1232, %v1236
        %v1238 = vrot.slane %v1069, 4
        %v1239 = vsel %vm738, %v1233, %v1238
        %v1240 = vrot.slane %v1070, 4
        %v1241 = vsel %vm738, %v1234, %v1240
        %v1242 = vrot.slane %v1071, 4
        %v1243 = vsel %vm738, %v1235, %v1242
        %v1260 = vrot.slane %v1128, 4
        %v1261 = vrot.slane %v1129, 4
        %v1262 = vrot.slane %v1130, 4
        %v1263 = vrot.slane %v1131, 4
        %v1264 = vrot.slane %v1132, 4
        %v1265 = vsel %vm738, %v1260, %v1264
        %v1266 = vrot.slane %v1133, 4
        %v1267 = vsel %vm738, %v1261, %v1266
        %v1268 = vrot.slane %v1134, 4
        %v1269 = vsel %vm738, %v1262, %v1268
        %v1270 = vrot.slane %v1135, 4
        %v1271 = vsel %vm738, %v1263, %v1270
        %v1280 = vsel %vm738, %v940, %v1176
        %v1281 = vsel %vm738, %v941, %v1177
        %v1282 = vsel %vm738, %v942, %v1178
        %v1283 = vsel %vm738, %v943, %v1179
        %v1284 = vsel %vm738, %v1004, %v1204
        %v1285 = vsel %vm738, %v1005, %v1205
        %v1286 = vsel %vm738, %v1006, %v1206
        %v1287 = vsel %vm738, %v1007, %v1207
        %v1288 = vsel %vm738, %v900, %v1232
        %v1289 = vsel %vm738, %v901, %v1233
        %v1290 = vsel %vm738, %v902, %v1234
        %v1291 = vsel %vm738, %v903, %v1235
        %v1292 = vsel %vm738, %v1100, %v1260
        %v1293 = vsel %vm738, %v1101, %v1261
        %v1294 = vsel %vm738, %v1102, %v1262
        %v1295 = vsel %vm738, %v1103, %v1263
        %v1296 = vpack.c.bf16 %v1280, %v936
        %v1297 = vpack.c.bf16 %v1281, %v937
        %v1298 = vpack.c.bf16 %v1282, %v938
        %v1299 = vpack.c.bf16 %v1283, %v939
        %v1300 = vpack.c.bf16 %v1000, %v1181
        %v1301 = vpack.c.bf16 %v1001, %v1183
        %v1302 = vpack.c.bf16 %v1002, %v1185
        %v1303 = vpack.c.bf16 %v1003, %v1187
        %v1304 = vpack.c.bf16 %v1209, %v1284
        %v1305 = vpack.c.bf16 %v1211, %v1285
        %v1306 = vpack.c.bf16 %v1213, %v1286
        %v1307 = vpack.c.bf16 %v1215, %v1287
        %v1308 = vpack.c.bf16 %v1288, %v896
        %v1309 = vpack.c.bf16 %v1289, %v897
        %v1310 = vpack.c.bf16 %v1290, %v898
        %v1311 = vpack.c.bf16 %v1291, %v899
        %v1312 = vpack.c.bf16 %v1096, %v1237
        %v1313 = vpack.c.bf16 %v1097, %v1239
        %v1314 = vpack.c.bf16 %v1098, %v1241
        %v1315 = vpack.c.bf16 %v1099, %v1243
        %v1316 = vpack.c.bf16 %v1265, %v1292
        %v1317 = vpack.c.bf16 %v1267, %v1293
        %v1318 = vpack.c.bf16 %v1269, %v1294
        %v1319 = vpack.c.bf16 %v1271, %v1295
        %v1320 = vpack.c.bf16 %v1164, %v1160
        %v1321 = vpack.c.bf16 %v1165, %v1161
        %v1322 = vpack.c.bf16 %v1166, %v1162
        %v1323 = vpack.c.bf16 %v1167, %v1163
        %v1326 = vunpack.c.l.b16 %v910
        %v1327 = vunpack.c.l.b16 %v911
        %v1328 = vpack.c.b16 %v1327, %v1326
        %vm1329 = vcmask 883712
        %v1331 = vsel %vm1329, %v1328, 0
        %v1334 = vsel %vm733, %v1320, 0
        %v1337 = vsel %vm733, %v1321, 0
        %v1340 = vsel %vm733, %v1322, 0
        %v1343 = vsel %vm733, %v1323, 0
        %1345 = vmatprep.subr.bf16.mxu0 0
        %1346 = vmatpush1.bf16.msra.mxu0 0
        %1347 = vmatprep.subr.bf16.mxu0 %v1337
        %1348 = vmatpush1.bf16.msra.mxu0 %v1334
        %1349 = vmatprep.subr.bf16.mxu0 %v1317
        %1350 = vmatpush1.bf16.msra.mxu0 %v1316
        %1351 = vmatprep.subr.bf16.mxu0 %v1313
        %1352 = vmatpush1.bf16.msra.mxu0 %v1312
        %1353 = vmatprep.subr.bf16.mxu0 %v1309
        %1354 = vmatpush1.bf16.msra.mxu0 %v1308
        %1355 = vmatprep.subr.bf16.mxu0 %v1305
        %1356 = vmatpush1.bf16.msra.mxu0 %v1304
        %1357 = vmatprep.subr.bf16.mxu0 %v1301
        %1358 = vmatpush1.bf16.msra.mxu0 %v1300
        %1359 = vmatprep.subr.bf16.mxu0 %v1297
        %1360 = vmatpush1.bf16.msra.mxu0 %v1296
        %1361 = vmatprep.subr.bf16.mxu0 0
        %1362 = vmatpush2.bf16.msra.mxu0 0
        %1363 = vmatprep.subr.bf16.mxu0 0
        %1364 = vmatpush2.bf16.msra.mxu0 0
        %1365 = vmatprep.subr.bf16.mxu0 0
        %1366 = vmatpush2.bf16.msra.mxu0 0
        %1367 = vmatprep.subr.bf16.mxu0 0
        %1368 = vmatpush2.bf16.msra.mxu0 0
        %1369 = vmatprep.subr.bf16.mxu0 0
        %1370 = vmatpush2.bf16.msra.mxu0 0
        %1371 = vmatprep.subr.bf16.mxu0 0
        %1372 = vmatpush2.bf16.msra.mxu0 0
        %1373 = vmatprep.subr.bf16.mxu0 0
        %1374 = vmatpush2.bf16.msra.mxu0 0
        %1375 = vmatprep.subr.bf16.mxu0 0
        %1376 = vmatpush2.bf16.msra.mxu0 0
        %1377 = vmatprep.mubr.bf16.mxu0 0
        %1378 = vmatmul.mubr.bf16.gmra.mxu0 %v1331
        %v1379 = vpop.f32.mrf.mxu0
        %v1380 = vadd.f32 0.0, %v1379
        %v1381 = vpop.f32.mrf.mxu0
        %v1382 = vadd.f32 0.0, %v1381
        %v1383 = vpop.f32.mrf.mxu0
        %v1384 = vadd.f32 0.0, %v1383
        %v1385 = vpop.f32.mrf.mxu0
        %v1386 = vadd.f32 0.0, %v1385
        %1387 = vdwg.mxu0
        %1388 = vmatprep.subr.bf16.mxu0 0
        %1389 = vmatpush1.bf16.msra.mxu0 0
        %1390 = vmatprep.subr.bf16.mxu0 %v1343
        %1391 = vmatpush1.bf16.msra.mxu0 %v1340
        %1392 = vmatprep.subr.bf16.mxu0 %v1319
        %1393 = vmatpush1.bf16.msra.mxu0 %v1318
        %1394 = vmatprep.subr.bf16.mxu0 %v1315
        %1395 = vmatpush1.bf16.msra.mxu0 %v1314
        %1396 = vmatprep.subr.bf16.mxu0 %v1311
        %1397 = vmatpush1.bf16.msra.mxu0 %v1310
        %1398 = vmatprep.subr.bf16.mxu0 %v1307
        %1399 = vmatpush1.bf16.msra.mxu0 %v1306
        %1400 = vmatprep.subr.bf16.mxu0 %v1303
        %1401 = vmatpush1.bf16.msra.mxu0 %v1302
        %1402 = vmatprep.subr.bf16.mxu0 %v1299
        %1403 = vmatpush1.bf16.msra.mxu0 %v1298
        %1404 = vmatprep.subr.bf16.mxu0 0
        %1405 = vmatpush2.bf16.msra.mxu0 0
        %1406 = vmatprep.subr.bf16.mxu0 0
        %1407 = vmatpush2.bf16.msra.mxu0 0
        %1408 = vmatprep.subr.bf16.mxu0 0
        %1409 = vmatpush2.bf16.msra.mxu0 0
        %1410 = vmatprep.subr.bf16.mxu0 0
        %1411 = vmatpush2.bf16.msra.mxu0 0
        %1412 = vmatprep.subr.bf16.mxu0 0
        %1413 = vmatpush2.bf16.msra.mxu0 0
        %1414 = vmatprep.subr.bf16.mxu0 0
        %1415 = vmatpush2.bf16.msra.mxu0 0
        %1416 = vmatprep.subr.bf16.mxu0 0
        %1417 = vmatpush2.bf16.msra.mxu0 0
        %1418 = vmatprep.subr.bf16.mxu0 0
        %1419 = vmatpush2.bf16.msra.mxu0 0
        %1420 = vmatprep.mubr.bf16.mxu0 0
        %1421 = vmatmul.mubr.bf16.gmra.mxu0 %v1331
        %v1422 = vpop.f32.mrf.mxu0
        %v1423 = vadd.f32 0.0, %v1422
        %v1424 = vpop.f32.mrf.mxu0
        %v1425 = vadd.f32 0.0, %v1424
        %v1426 = vpop.f32.mrf.mxu0
        %v1427 = vadd.f32 0.0, %v1426
        %v1428 = vpop.f32.mrf.mxu0
        %v1429 = vadd.f32 0.0, %v1428
        %1430 = vdwg.mxu0
        %v1433 = vunpack.c.l.b16 %v904
        %v1434 = vunpack.c.l.b16 %v905
        %v1435 = vpack.c.b16 %v1434, %v1433
        %vm1436 = vcmask 48128
        %v1438 = vsel %vm1436, %v1435, 0
        %v1441 = vsel %vm797, %v906, 0
        %v1444 = vsel %vm797, %v907, 0
        %v1447 = vsel %vm797, %v908, 0
        %v1450 = vsel %vm797, %v909, 0
        %1452 = vmatprep.subr.bf16.mxu0 0
        %1453 = vmatpush1.bf16.msra.mxu0 0
        %1454 = vmatprep.subr.bf16.mxu0 0
        %1455 = vmatpush1.bf16.msra.mxu0 0
        %1456 = vmatprep.subr.bf16.mxu0 0
        %1457 = vmatpush1.bf16.msra.mxu0 0
        %1458 = vmatprep.subr.bf16.mxu0 0
        %1459 = vmatpush1.bf16.msra.mxu0 0
        %1460 = vmatprep.subr.bf16.mxu0 0
        %1461 = vmatpush1.bf16.msra.mxu0 0
        %1462 = vmatprep.subr.bf16.mxu0 0
        %1463 = vmatpush1.bf16.msra.mxu0 0
        %1464 = vmatprep.subr.bf16.mxu0 0
        %1465 = vmatpush1.bf16.msra.mxu0 0
        %1466 = vmatprep.subr.bf16.mxu0 %v1444
        %1467 = vmatpush1.bf16.msra.mxu0 %v1441
        %1468 = vmatprep.subr.bf16.mxu0 0
        %1469 = vmatpush2.bf16.msra.mxu0 0
        %1470 = vmatprep.subr.bf16.mxu0 0
        %1471 = vmatpush2.bf16.msra.mxu0 0
        %1472 = vmatprep.subr.bf16.mxu0 0
        %1473 = vmatpush2.bf16.msra.mxu0 0
        %1474 = vmatprep.subr.bf16.mxu0 0
        %1475 = vmatpush2.bf16.msra.mxu0 0
        %1476 = vmatprep.subr.bf16.mxu0 0
        %1477 = vmatpush2.bf16.msra.mxu0 0
        %1478 = vmatprep.subr.bf16.mxu0 0
        %1479 = vmatpush2.bf16.msra.mxu0 0
        %1480 = vmatprep.subr.bf16.mxu0 0
        %1481 = vmatpush2.bf16.msra.mxu0 0
        %1482 = vmatprep.subr.bf16.mxu0 0
        %1483 = vmatpush2.bf16.msra.mxu0 0
        %1484 = vmatprep.mubr.bf16.mxu0 0
        %1485 = vmatmul.mubr.bf16.gmra.mxu0 %v1438
        %v1486 = vpop.f32.mrf.mxu0
        %v1487 = vadd.f32 %v1380, %v1486
        %v1488 = vpop.f32.mrf.mxu0
        %v1489 = vadd.f32 %v1382, %v1488
        %v1490 = vpop.f32.mrf.mxu0
        %v1491 = vadd.f32 %v1384, %v1490
        %v1492 = vpop.f32.mrf.mxu0
        %v1493 = vadd.f32 %v1386, %v1492
        %1494 = vdwg.mxu0
        %1495 = vmatprep.subr.bf16.mxu0 0
        %1496 = vmatpush1.bf16.msra.mxu0 0
        %1497 = vmatprep.subr.bf16.mxu0 0
        %1498 = vmatpush1.bf16.msra.mxu0 0
        %1499 = vmatprep.subr.bf16.mxu0 0
        %1500 = vmatpush1.bf16.msra.mxu0 0
        %1501 = vmatprep.subr.bf16.mxu0 0
        %1502 = vmatpush1.bf16.msra.mxu0 0
        %1503 = vmatprep.subr.bf16.mxu0 0
        %1504 = vmatpush1.bf16.msra.mxu0 0
        %1505 = vmatprep.subr.bf16.mxu0 0
        %1506 = vmatpush1.bf16.msra.mxu0 0
        %1507 = vmatprep.subr.bf16.mxu0 0
        %1508 = vmatpush1.bf16.msra.mxu0 0
        %1509 = vmatprep.subr.bf16.mxu0 %v1450
        %1510 = vmatpush1.bf16.msra.mxu0 %v1447
        %1511 = vmatprep.subr.bf16.mxu0 0
        %1512 = vmatpush2.bf16.msra.mxu0 0
        %1513 = vmatprep.subr.bf16.mxu0 0
        %1514 = vmatpush2.bf16.msra.mxu0 0
        %1515 = vmatprep.subr.bf16.mxu0 0
        %1516 = vmatpush2.bf16.msra.mxu0 0
        %1517 = vmatprep.subr.bf16.mxu0 0
        %1518 = vmatpush2.bf16.msra.mxu0 0
        %1519 = vmatprep.subr.bf16.mxu0 0
        %1520 = vmatpush2.bf16.msra.mxu0 0
        %1521 = vmatprep.subr.bf16.mxu0 0
        %1522 = vmatpush2.bf16.msra.mxu0 0
        %1523 = vmatprep.subr.bf16.mxu0 0
        %1524 = vmatpush2.bf16.msra.mxu0 0
        %1525 = vmatprep.subr.bf16.mxu0 0
        %1526 = vmatpush2.bf16.msra.mxu0 0
        %1527 = vmatprep.mubr.bf16.mxu0 0
        %1528 = vmatmul.mubr.bf16.gmra.mxu0 %v1438
        %v1529 = vpop.f32.mrf.mxu0
        %v1530 = vadd.f32 %v1423, %v1529
        %v1531 = vpop.f32.mrf.mxu0
        %v1532 = vadd.f32 %v1425, %v1531
        %v1533 = vpop.f32.mrf.mxu0
        %v1534 = vadd.f32 %v1427, %v1533
        %v1535 = vpop.f32.mrf.mxu0
        %v1536 = vadd.f32 %v1429, %v1535
        %1537 = vdwg.mxu0
        %1538 = vst [vmem:[%s294] sm:$0xff] %v1487
        %1539 = vst [vmem:[%s294 + $0x8] sm:$0xff] %v1489
        %1540 = vst [vmem:[%s294 + $0x10] sm:$0xff] %v1530
        %1541 = vst [vmem:[%s294 + $0x18] sm:$0xff] %v1532
        %1542 = vst [vmem:[%s294 + $0x20] sm:$0xf] %v1491
        %1543 = vst [vmem:[%s294 + $0x28] sm:$0xf] %v1493
        %1544 = vst [vmem:[%s294 + $0x30] sm:$0xf] %v1534
        %1545 = vst [vmem:[%s294 + $0x38] sm:$0xf] %v1536
        %s1546 = sand.u32 %s184, 1
        %s1547 = scalar_lea.sflag [#allocation4], %s1546
        %s1548 = sand.u32 %s184, 1
        %s1549 = smul.addr %s1548, 64
        %s1550 = scalar_lea.vmem [#allocation5], %s1549
        // Predicated region
        $region53: #{tpu_custom_call.1} parent=47 // pred_check
          %p1551 = pneg %p194
        $region54: #{tpu_custom_call.1} parent=47 // pred_check_branch
          %1553 = sbr.rel (%p1551) target = $region56
        $region55: #{tpu_custom_call.1} parent=47 // pred_region
          %s1554 = smul.u32 4, %s24
          %s1556 = ssub.s32 1024, 1024
          %1557 = vsyncadd %s1547, %s1556
          %s1558 = smul.addr %s1554, 128
          %s1559 = scalar_lea.hbm %s7, %s1558
          %s1560 = sshll.u32 %s1550, 4
          %s1561 = int_to_ptr.vmem [resolvable:$true] %s1560
          %1566 = dma.vmem_to_hbm [thread:$0]  %s1561, 1024, %s1559, %s1547, 512, 1024, 32
        $region56: #{tpu_custom_call.1} parent=47 // pred_fallthru
          _
      $region48: #{tpu_custom_call.1} parent=5 // pred_fallthru
        _
      %p1567 = scmp.le.s32.totalorder 2, %s19
      // Predicated region
      $region57: #{tpu_custom_call.1} parent=5 // pred_check
        %p1568 = pneg %p1567
      $region58: #{tpu_custom_call.1} parent=5 // pred_check_branch
        %1570 = sbr.rel (%p1568) target = $region60
      $region59: #{tpu_custom_call.1} parent=5 // pred_region
        %s1571 = ssub.s32 %s19, 2
        // Predicated region
        $region61: #{tpu_custom_call.1} parent=59 // pred_check
          %p1572 = pneg %p200
        $region62: #{tpu_custom_call.1} parent=59 // pred_check_branch
          %1574 = sbr.rel (%p1572) target = $region64
        $region63: #{tpu_custom_call.1} parent=59 // pred_region
          %s1575 = sand.u32 %s185, 1
          %s1576 = scalar_lea.sflag [#allocation4], %s1575
          %s1577 = sand.u32 %s185, 1
          %s1578 = smul.addr %s1577, 64
          %s1579 = scalar_lea.vmem [#allocation5], %s1578
          %1580 = dma.done %s1576, 1024
        $region64: #{tpu_custom_call.1} parent=59 // pred_fallthru
          _
      $region60: #{tpu_custom_call.1} parent=5 // pred_fallthru
        _
    $region6: #{tpu_custom_call.1} parent=1 // loop_footer
      %s23 = sadd.s32 1, %s19
    $region7: #{tpu_custom_call.1} parent=1 // loop_footer_branch
      %18 = sbr.rel target = $region3
    $region8: #{tpu_custom_call.1} parent=1 // loop_exit
      _
    %1581 = vsyncpa [#allocation3], 1
    %s1582 = scalar_lea.sflag [#allocation3], 1
    %1583 = vsyncpa %s1582, 1
    %1584 = vsyncpa [#allocation4], 1
    %s1585 = scalar_lea.sflag [#allocation4], 1
    %1586 = vsyncpa %s1585, 1

</llo_original>
